<compile_context>
chip_gen: v6e
topology: v6e:2x2x1
jax: 0.10.0
libtpu: 0.0.40
codegen_flags: <defaults>
</compile_context>

<pallas_src>
import functools

import jax
import jax.numpy as jnp
import numpy as np
from jax.experimental import pallas as pl
from jax.experimental.pallas import tpu as pltpu


def _scconv_kernel(x_ref, gnw_ref, gnb_ref, wg_ref, agrp_ref, sq1_ref, sq2_ref,
                   gwt_ref, mask_ref, gwcb_ref, wy2_ref, o_ref, *,
                   group_elems, eps, gate_threshold, taps):
    f32 = jnp.float32
    nb, c, hw = o_ref.shape
    inv_ge = 1.0 / group_elems
    inv_gem1 = 1.0 / (group_elems - 1)
    inv_hw = 1.0 / hw

    gnw = gnw_ref[...]                     # (C, 1)
    gnb = gnb_ref[...]                     # (C, 1)
    wg = wg_ref[...]                       # (C, 1)
    agrp = agrp_ref[...]                   # (C, C) group membership (0/1)
    sq1 = sq1_ref[...]                     # (c4u, C)
    sq2 = sq2_ref[...]                     # (c4l, C)
    gwcb = gwcb_ref[...]                   # (C, 1)
    wy2 = wy2_ref[...]                     # (C, c4l)

    # Static unrolled loop over the images packed into this grid step.
    for b in range(nb):
        x = x_ref[b].astype(f32)                                   # (C, HW)

        # ---- SRU: GroupBatchnorm2d (unbiased std, eps added to std) --------
        # Lane reductions (XLU) -> (C,1), then a tiny (C,C)@(C,1) dot
        # broadcasts the per-group statistics back to every channel.
        xsum = jnp.sum(x, axis=1, keepdims=True)                   # (C, 1)
        mean = jnp.dot(agrp, xsum, preferred_element_type=f32) * inv_ge
        xc = x - mean
        ssum = jnp.sum(xc * xc, axis=1, keepdims=True)             # (C, 1)
        var = jnp.dot(agrp, ssum, preferred_element_type=f32) * inv_gem1
        gn = (xc / (jnp.sqrt(var) + eps)) * gnw + gnb

        # ---- SRU: sigmoid gate, threshold, half-swap reconstruct -----------
        rew = jax.nn.sigmoid(gn * wg)
        x1 = jnp.where(rew >= gate_threshold, gn, 0.0)
        x2 = gn - x1                                               # complement
        # Half-swap of channel halves == sublane rotation by C/2 (XLU).
        x_sru = x1 + pltpu.roll(x2, shift=c // 2, axis=0)

        # ---- CRU: squeeze convs (channel split folded into the weights) ----
        up_s = jnp.dot(sq1, x_sru, preferred_element_type=f32)     # (c4u, HW)
        low_s = jnp.dot(sq2, x_sru, preferred_element_type=f32)    # (c4l, HW)

        # ---- CRU: Y1 = GWC(up_s) + PWC1(up_s) + bias ------------------------
        # Centre tap (identity shift; PWC1 folded in) seeds the accumulator,
        # the 8 neighbour taps are lane rolls + 0/1 edge masks on the tiny
        # squeezed activations (done BEFORE channel expansion).
        y1 = jnp.dot(gwt_ref[4], up_s, preferred_element_type=f32) + gwcb
        for t, lane_shift in taps:
            shifted = pltpu.roll(up_s, shift=lane_shift, axis=1) * mask_ref[t]
            y1 = y1 + jnp.dot(gwt_ref[t], shifted, preferred_element_type=f32)

        # ---- CRU: Y2 = cat([PWC2(low_s), low_s]) == [W_pwc2; I] @ low_s -----
        y2 = jnp.dot(wy2, low_s, preferred_element_type=f32)       # (C, HW)

        # ---- CRU: softmax channel attention over the 2C pooled channels ----
        p1 = jnp.sum(y1, axis=1, keepdims=True) * inv_hw           # (C, 1)
        p2 = jnp.sum(y2, axis=1, keepdims=True) * inv_hw
        m = jnp.maximum(jnp.max(p1, axis=0, keepdims=True),
                        jnp.max(p2, axis=0, keepdims=True))        # (1, 1)
        e1 = jnp.exp(p1 - m)
        e2 = jnp.exp(p2 - m)
        inv_z = 1.0 / (jnp.sum(e1, axis=0, keepdims=True)
                       + jnp.sum(e2, axis=0, keepdims=True))
        o_ref[b] = ((e1 * inv_z) * y1 + (e2 * inv_z) * y2).astype(o_ref.dtype)


def scconv_pallas(x, params, *, group_num=4, gate_treshold=0.5, alpha=0.5,
                  squeeze_radio=2, group_size=2, group_kernel_size=3,
                  eps=1e-10, block_n=None):
    N, C, H, W = x.shape
    HW = H * W
    assert C % group_num == 0 and C % 2 == 0
    assert group_kernel_size == 3, "tap rolls/masks below are built for 3x3"
    up_c = int(alpha * C)
    low_c = C - up_c
    c4u = up_c // squeeze_radio
    c4l = low_c // squeeze_radio

    # ---- fold the module structure into weight matrices (host-side) --------
    gn_w = np.asarray(params["gn_weight"], np.float32).reshape(C, 1)
    gn_b = np.asarray(params["gn_bias"], np.float32).reshape(C, 1)
    w_gamma = gn_w / gn_w.sum()

    sq1 = np.asarray(params["sq1_w"], np.float32)[:, :, 0, 0]        # (c4u, up_c)
    sq2 = np.asarray(params["sq2_w"], np.float32)[:, :, 0, 0]        # (c4l, low_c)
    gwc_w = np.asarray(params["gwc_w"], np.float32)                  # (C, c4u//gs, 3, 3)
    gwc_b = np.asarray(params["gwc_b"], np.float32).reshape(C, 1)
    pwc1 = np.asarray(params["pwc1_w"], np.float32)[:, :, 0, 0]      # (C, c4u)
    pwc2 = np.asarray(params["pwc2_w"], np.float32)[:, :, 0, 0]      # (C-c4l, c4l)

    # Group membership matrix (broadcasts per-group sums back to channels).
    gid = np.arange(C) // (C // group_num)
    agrp = (gid[:, None] == gid[None, :]).astype(np.float32)

    # Channel split folded into zero-padded squeeze weights.
    sq1_full = np.zeros((c4u, C), np.float32)
    sq1_full[:, :up_c] = sq1
    sq2_full = np.zeros((c4l, C), np.float32)
    sq2_full[:, up_c:] = sq2

    # GWC: 9 taps of block-diagonal (C, c4u) weights; PWC1 folded into the
    # centre tap (whose spatial shift is the identity).
    cig = c4u // group_size
    cog = C // group_size
    gw_taps = np.zeros((9, C, c4u), np.float32)
    for ky in range(3):
        for kx in range(3):
            t = ky * 3 + kx
            for g in range(group_size):
                gw_taps[t, g * cog:(g + 1) * cog, g * cig:(g + 1) * cig] = \
                    gwc_w[g * cog:(g + 1) * cog, :, ky, kx]
    gw_taps[4] += pwc1

    # Y2 weight: cat([PWC2(low_s), low_s]) == [W_pwc2; I] @ low_s
    wy2 = np.concatenate([pwc2, np.eye(c4l, dtype=np.float32)], axis=0)  # (C, c4l)

    # 3x3 tap lane-roll amounts + 0/1 edge masks over the flattened (y, x)
    # positions.  ~9*HW floats -- replaces the old (9, HW, HW) shift matmuls.
    yy, xx = np.divmod(np.arange(HW), W)
    masks = np.zeros((9, 1, HW), np.float32)
    taps = []                                  # (tap index, lane roll) for t != 4
    for ky in range(3):
        for kx in range(3):
            t = ky * 3 + kx
            dy, dx = ky - 1, kx - 1
            valid = ((yy + dy >= 0) & (yy + dy < H) &
                     (xx + dx >= 0) & (xx + dx < W))
            masks[t, 0, valid] = 1.0
            if t != 4:
                # rolled[p] = up_s[(p + dy*W + dx) mod HW]; wrapped lanes are
                # exactly the masked (invalid) ones, so the result is exact.
                taps.append((t, (-(dy * W + dx)) % HW))
    taps = tuple(taps)

    # Images per grid step: amortize the ~0.35us/step overhead (matters on the
    # single-TC v5e/v6e) while keeping >=2 grid steps so both v7x TensorCores
    # stay busy when batching.
    if block_n is None:
        block_n = 1
        for cand in (8, 4, 2):
            if N % cand == 0 and N // cand >= 2:
                block_n = cand
                break
    assert N % block_n == 0

    x_flat = x.reshape(N, C, HW)          # free reshape, stays channel-major NCHW

    operands = [
        x_flat,
        jnp.asarray(gn_w), jnp.asarray(gn_b), jnp.asarray(w_gamma),
        jnp.asarray(agrp),
        jnp.asarray(sq1_full), jnp.asarray(sq2_full),
        jnp.asarray(gw_taps), jnp.asarray(masks),
        jnp.asarray(gwc_b), jnp.asarray(wy2),
    ]

    def const_spec(arr):
        zeros = (0,) * arr.ndim
        return pl.BlockSpec(tuple(arr.shape), lambda b, z=zeros: z)

    in_specs = [pl.BlockSpec((block_n, C, HW), lambda b: (b, 0, 0))]
    in_specs += [const_spec(op) for op in operands[1:]]

    kernel = functools.partial(
        _scconv_kernel,
        group_elems=(C // group_num) * HW,
        eps=eps,
        gate_threshold=gate_treshold,
        taps=taps,
    )

    out = pl.pallas_call(
        kernel,
        out_shape=jax.ShapeDtypeStruct((N, C, HW), x.dtype),
        grid_spec=pltpu.PrefetchScalarGridSpec(
            num_scalar_prefetch=0,
            grid=(N // block_n,),
            in_specs=in_specs,
            out_specs=pl.BlockSpec((block_n, C, HW), lambda b: (b, 0, 0)),
        ),
        # Per-step VMEM is now only a few hundred KB (no HWxHW operators), so
        # the default scoped VMEM limit is sufficient on v5e/v6e/v7x alike.
        compiler_params=pltpu.CompilerParams(
            dimension_semantics=("parallel",),
        ),
    )(*operands)

    return out.reshape(N, C, H, W)


def scconv_reference(x, params, *, group_num=4, gate_treshold=0.5, alpha=0.5,
                     group_size=2, eps=1e-10):
    """Pure-JAX reference mirroring the PyTorch ScConv forward (NCHW)."""
    N, C, H, W = x.shape
    # SRU / GroupBatchnorm2d
    xg = x.reshape(N, group_num, -1)
    mean = jnp.mean(xg, axis=2, keepdims=True)
    std = jnp.std(xg, axis=2, keepdims=True, ddof=1)
    xn = ((xg - mean) / (std + eps)).reshape(N, C, H, W)
    gamma = params["gn_weight"].reshape(1, C, 1, 1)
    beta = params["gn_bias"].reshape(1, C, 1, 1)
    gn_x = xn * gamma + beta
    w_gamma = (params["gn_weight"] / jnp.sum(params["gn_weight"])).reshape(1, C, 1, 1)
    rew = jax.nn.sigmoid(gn_x * w_gamma)
    x1 = jnp.where(rew >= gate_treshold, gn_x, 0.0)
    x2 = jnp.where(rew < gate_treshold, gn_x, 0.0)
    h = C // 2
    x_sru = jnp.concatenate([x1[:, :h] + x2[:, h:], x1[:, h:] + x2[:, :h]], axis=1)

    # CRU
    up_c = int(alpha * C)
    up, low = x_sru[:, :up_c], x_sru[:, up_c:]

    def conv1x1(z, w):
        return jnp.einsum("oi,nihw->nohw", w[:, :, 0, 0], z)

    up_s = conv1x1(up, params["sq1_w"])
    low_s = conv1x1(low, params["sq2_w"])
    gwc = jax.lax.conv_general_dilated(
        up_s, params["gwc_w"], window_strides=(1, 1), padding=((1, 1), (1, 1)),
        dimension_numbers=("NCHW", "OIHW", "NCHW"),
        feature_group_count=group_size,
    ) + params["gwc_b"].reshape(1, C, 1, 1)
    y1 = gwc + conv1x1(up_s, params["pwc1_w"])
    y2 = jnp.concatenate([conv1x1(low_s, params["pwc2_w"]), low_s], axis=1)
    both = jnp.concatenate([y1, y2], axis=1)
    s = jax.nn.softmax(jnp.mean(both, axis=(2, 3), keepdims=True), axis=1)
    both = s * both
    return both[:, :C] + both[:, C:]


if __name__ == "__main__":
    # op_channel must satisfy: C % group_num == 0 and (C//4) % group_size == 0.
    N, C, H, W = 2, 8, 16, 16
    group_num, group_size, squeeze_radio, alpha = 4, 2, 2, 0.5
    up_c = int(alpha * C)
    low_c = C - up_c
    c4u = up_c // squeeze_radio
    c4l = low_c // squeeze_radio

    key = jax.random.PRNGKey(0)
    ks = jax.random.split(key, 9)
    x = jax.random.normal(ks[0], (N, C, H, W), dtype=jnp.float32)
    params = {
        "gn_weight": 1.0 + 0.1 * jax.random.normal(ks[1], (C,), dtype=jnp.float32),
        "gn_bias": 0.1 * jax.random.normal(ks[2], (C,), dtype=jnp.float32),
        "sq1_w": 0.3 * jax.random.normal(ks[3], (c4u, up_c, 1, 1), dtype=jnp.float32),
        "sq2_w": 0.3 * jax.random.normal(ks[4], (c4l, low_c, 1, 1), dtype=jnp.float32),
        "gwc_w": 0.3 * jax.random.normal(ks[5], (C, c4u // group_size, 3, 3), dtype=jnp.float32),
        "gwc_b": 0.1 * jax.random.normal(ks[6], (C,), dtype=jnp.float32),
        "pwc1_w": 0.3 * jax.random.normal(ks[7], (C, c4u, 1, 1), dtype=jnp.float32),
        "pwc2_w": 0.3 * jax.random.normal(ks[8], (C - c4l, c4l, 1, 1), dtype=jnp.float32),
    }

    out = scconv_pallas(x, params, group_num=group_num, gate_treshold=0.5,
                        alpha=alpha, squeeze_radio=squeeze_radio,
                        group_size=group_size, group_kernel_size=3)
    jax.block_until_ready(out)

    ref = scconv_reference(x, params, group_num=group_num, gate_treshold=0.5,
                           alpha=alpha, group_size=group_size)
    assert out.shape == (N, C, H, W)
    max_err = float(jnp.max(jnp.abs(out - ref)))
    assert jnp.allclose(out, ref, atol=1e-4, rtol=1e-4), max_err

    print("KERNEL_OK")
</pallas_src>

<mosaic_0001>
module attributes {stable_mosaic.version = 11 : i64} {
  func.func @_scconv_kernel(%arg0: i32, %arg1: memref<1x8x256xf32, #tpu.memory_space<vmem>>, %arg2: memref<8x1xf32, #tpu.memory_space<vmem>>, %arg3: memref<8x1xf32, #tpu.memory_space<vmem>>, %arg4: memref<8x1xf32, #tpu.memory_space<vmem>>, %arg5: memref<8x8xf32, #tpu.memory_space<vmem>>, %arg6: memref<2x8xf32, #tpu.memory_space<vmem>>, %arg7: memref<2x8xf32, #tpu.memory_space<vmem>>, %arg8: memref<9x8x2xf32, #tpu.memory_space<vmem>>, %arg9: memref<9x1x256xf32, #tpu.memory_space<vmem>>, %arg10: memref<8x1xf32, #tpu.memory_space<vmem>>, %arg11: memref<8x2xf32, #tpu.memory_space<vmem>>, %arg12: memref<1x8x256xf32, #tpu.memory_space<vmem>>) attributes {dimension_semantics = [#tpu.dimension_semantics<parallel>], iteration_bounds = array<i64: 2>, scalar_prefetch = 0 : i64, scratch_operands = 0 : i64, tpu.core_type = #tpu.core_type<tc>, window_params = [{transform_indices = @transform_0, window_bounds = array<i64: 1, 8, 256>}, {pipeline_mode = #tpu.pipeline_mode<synchronous>, transform_indices = @transform_1, window_bounds = array<i64: 8, 1>}, {pipeline_mode = #tpu.pipeline_mode<synchronous>, transform_indices = @transform_2, window_bounds = array<i64: 8, 1>}, {pipeline_mode = #tpu.pipeline_mode<synchronous>, transform_indices = @transform_3, window_bounds = array<i64: 8, 1>}, {pipeline_mode = #tpu.pipeline_mode<synchronous>, transform_indices = @transform_4, window_bounds = array<i64: 8, 8>}, {pipeline_mode = #tpu.pipeline_mode<synchronous>, transform_indices = @transform_5, window_bounds = array<i64: 2, 8>}, {pipeline_mode = #tpu.pipeline_mode<synchronous>, transform_indices = @transform_6, window_bounds = array<i64: 2, 8>}, {pipeline_mode = #tpu.pipeline_mode<synchronous>, transform_indices = @transform_7, window_bounds = array<i64: 9, 8, 2>}, {pipeline_mode = #tpu.pipeline_mode<synchronous>, transform_indices = @transform_8, window_bounds = array<i64: 9, 1, 256>}, {pipeline_mode = #tpu.pipeline_mode<synchronous>, transform_indices = @transform_9, window_bounds = array<i64: 8, 1>}, {pipeline_mode = #tpu.pipeline_mode<synchronous>, transform_indices = @transform_10, window_bounds = array<i64: 8, 2>}, {transform_indices = @transform_11, window_bounds = array<i64: 1, 8, 256>}]} {
    %c0 = arith.constant 0 : index
    %c0_0 = arith.constant 0 : index
    %0 = vector.load %arg2[%c0, %c0_0] : memref<8x1xf32, #tpu.memory_space<vmem>>, vector<8x1xf32>
    %c0_1 = arith.constant 0 : index
    %c0_2 = arith.constant 0 : index
    %1 = vector.load %arg3[%c0_1, %c0_2] : memref<8x1xf32, #tpu.memory_space<vmem>>, vector<8x1xf32>
    %c0_3 = arith.constant 0 : index
    %c0_4 = arith.constant 0 : index
    %2 = vector.load %arg4[%c0_3, %c0_4] : memref<8x1xf32, #tpu.memory_space<vmem>>, vector<8x1xf32>
    %c0_5 = arith.constant 0 : index
    %c0_6 = arith.constant 0 : index
    %3 = vector.load %arg5[%c0_5, %c0_6] : memref<8x8xf32, #tpu.memory_space<vmem>>, vector<8x8xf32>
    %c0_7 = arith.constant 0 : index
    %c0_8 = arith.constant 0 : index
    %4 = vector.load %arg6[%c0_7, %c0_8] : memref<2x8xf32, #tpu.memory_space<vmem>>, vector<2x8xf32>
    %c0_9 = arith.constant 0 : index
    %c0_10 = arith.constant 0 : index
    %5 = vector.load %arg7[%c0_9, %c0_10] : memref<2x8xf32, #tpu.memory_space<vmem>>, vector<2x8xf32>
    %c0_11 = arith.constant 0 : index
    %c0_12 = arith.constant 0 : index
    %6 = vector.load %arg10[%c0_11, %c0_12] : memref<8x1xf32, #tpu.memory_space<vmem>>, vector<8x1xf32>
    %c0_13 = arith.constant 0 : index
    %c0_14 = arith.constant 0 : index
    %7 = vector.load %arg11[%c0_13, %c0_14] : memref<8x2xf32, #tpu.memory_space<vmem>>, vector<8x2xf32>
    %c0_15 = arith.constant 0 : index
    %c0_16 = arith.constant 0 : index
    %c0_17 = arith.constant 0 : index
    %8 = vector.load %arg1[%c0_15, %c0_16, %c0_17] : memref<1x8x256xf32, #tpu.memory_space<vmem>>, vector<1x8x256xf32>
    %9 = vector.shape_cast %8 : vector<1x8x256xf32> to vector<8x256xf32>
    %cst = arith.constant dense<0.000000e+00> : vector<8xf32>
    %10 = vector.multi_reduction <add>, %9, %cst [1] : vector<8x256xf32> to vector<8xf32>
    %11 = vector.shape_cast %10 : vector<8xf32> to vector<8x1xf32>
    %cst_18 = arith.constant dense<0.000000e+00> : vector<8x1xf32>
    %12 = tpu.matmul %3, %11, %cst_18 {dimension_numbers = #tpu.dot_dimension_numbers<[1], [0], [0], [1], [0, 0, 1, 1], [], []>} : vector<8x8xf32>, vector<8x1xf32>, vector<8x1xf32> -> vector<8x1xf32>
    %cst_19 = arith.constant 0.001953125 : f32
    %13 = vector.broadcast %cst_19 : f32 to vector<8x1xf32>
    %14 = arith.mulf %12, %13 : vector<8x1xf32>
    %15 = vector.broadcast %14 : vector<8x1xf32> to vector<8x256xf32>
    %16 = arith.subf %9, %15 : vector<8x256xf32>
    %17 = arith.mulf %16, %16 : vector<8x256xf32>
    %cst_20 = arith.constant dense<0.000000e+00> : vector<8xf32>
    %18 = vector.multi_reduction <add>, %17, %cst_20 [1] : vector<8x256xf32> to vector<8xf32>
    %19 = vector.shape_cast %18 : vector<8xf32> to vector<8x1xf32>
    %cst_21 = arith.constant dense<0.000000e+00> : vector<8x1xf32>
    %20 = tpu.matmul %3, %19, %cst_21 {dimension_numbers = #tpu.dot_dimension_numbers<[1], [0], [0], [1], [0, 0, 1, 1], [], []>} : vector<8x8xf32>, vector<8x1xf32>, vector<8x1xf32> -> vector<8x1xf32>
    %cst_22 = arith.constant 0.00195694715 : f32
    %21 = vector.broadcast %cst_22 : f32 to vector<8x1xf32>
    %22 = arith.mulf %20, %21 : vector<8x1xf32>
    %23 = math.sqrt %22 : vector<8x1xf32>
    %cst_23 = arith.constant 1.000000e-10 : f32
    %24 = vector.broadcast %cst_23 : f32 to vector<8x1xf32>
    %25 = arith.addf %23, %24 : vector<8x1xf32>
    %26 = vector.broadcast %25 : vector<8x1xf32> to vector<8x256xf32>
    %27 = arith.divf %16, %26 : vector<8x256xf32>
    %28 = vector.broadcast %0 : vector<8x1xf32> to vector<8x256xf32>
    %29 = arith.mulf %27, %28 : vector<8x256xf32>
    %30 = vector.broadcast %1 : vector<8x1xf32> to vector<8x256xf32>
    %31 = arith.addf %29, %30 : vector<8x256xf32>
    %32 = vector.broadcast %2 : vector<8x1xf32> to vector<8x256xf32>
    %33 = arith.mulf %31, %32 : vector<8x256xf32>
    %34 = arith.negf %33 : vector<8x256xf32>
    %35 = math.exp %34 : vector<8x256xf32>
    %cst_24 = arith.constant 1.000000e+00 : f32
    %36 = vector.broadcast %cst_24 : f32 to vector<8x256xf32>
    %37 = arith.addf %36, %35 : vector<8x256xf32>
    %38 = arith.divf %36, %37 : vector<8x256xf32>
    %cst_25 = arith.constant 5.000000e-01 : f32
    %39 = vector.broadcast %cst_25 : f32 to vector<8x256xf32>
    %40 = arith.cmpf oge, %38, %39 : vector<8x256xf32>
    %cst_26 = arith.constant 0.000000e+00 : f32
    %41 = vector.broadcast %cst_26 : f32 to vector<8x256xf32>
    %42 = arith.select %40, %31, %41 : vector<8x256xi1>, vector<8x256xf32>
    %43 = arith.subf %31, %42 : vector<8x256xf32>
    %c4_i32 = arith.constant 4 : i32
    %44 = tpu.dynamic_rotate %43 by %c4_i32 dim 0 : vector<8x256xf32>, i32 -> vector<8x256xf32>
    %45 = arith.addf %42, %44 : vector<8x256xf32>
    %cst_27 = arith.constant dense<0.000000e+00> : vector<2x256xf32>
    %46 = tpu.matmul %4, %45, %cst_27 {dimension_numbers = #tpu.dot_dimension_numbers<[1], [0], [0], [1], [0, 0, 1, 1], [], []>} : vector<2x8xf32>, vector<8x256xf32>, vector<2x256xf32> -> vector<2x256xf32>
    %cst_28 = arith.constant dense<0.000000e+00> : vector<2x256xf32>
    %47 = tpu.matmul %5, %45, %cst_28 {dimension_numbers = #tpu.dot_dimension_numbers<[1], [0], [0], [1], [0, 0, 1, 1], [], []>} : vector<2x8xf32>, vector<8x256xf32>, vector<2x256xf32> -> vector<2x256xf32>
    %c4 = arith.constant 4 : index
    %c0_29 = arith.constant 0 : index
    %c0_30 = arith.constant 0 : index
    %48 = vector.load %arg8[%c4, %c0_29, %c0_30] : memref<9x8x2xf32, #tpu.memory_space<vmem>>, vector<1x8x2xf32>
    %49 = vector.shape_cast %48 : vector<1x8x2xf32> to vector<8x2xf32>
    %cst_31 = arith.constant dense<0.000000e+00> : vector<8x256xf32>
    %50 = tpu.matmul %49, %46, %cst_31 {dimension_numbers = #tpu.dot_dimension_numbers<[1], [0], [0], [1], [0, 0, 1, 1], [], []>} : vector<8x2xf32>, vector<2x256xf32>, vector<8x256xf32> -> vector<8x256xf32>
    %51 = vector.broadcast %6 : vector<8x1xf32> to vector<8x256xf32>
    %52 = arith.addf %50, %51 : vector<8x256xf32>
    %c17_i32 = arith.constant 17 : i32
    %53 = tpu.dynamic_rotate %46 by %c17_i32 dim 1 : vector<2x256xf32>, i32 -> vector<2x256xf32>
    %c0_32 = arith.constant 0 : index
    %c0_33 = arith.constant 0 : index
    %c0_34 = arith.constant 0 : index
    %54 = vector.load %arg9[%c0_32, %c0_33, %c0_34] : memref<9x1x256xf32, #tpu.memory_space<vmem>>, vector<1x1x256xf32>
    %55 = vector.shape_cast %54 : vector<1x1x256xf32> to vector<1x256xf32>
    %56 = vector.broadcast %55 : vector<1x256xf32> to vector<2x256xf32>
    %57 = arith.mulf %53, %56 : vector<2x256xf32>
    %c0_35 = arith.constant 0 : index
    %c0_36 = arith.constant 0 : index
    %c0_37 = arith.constant 0 : index
    %58 = vector.load %arg8[%c0_35, %c0_36, %c0_37] : memref<9x8x2xf32, #tpu.memory_space<vmem>>, vector<1x8x2xf32>
    %59 = vector.shape_cast %58 : vector<1x8x2xf32> to vector<8x2xf32>
    %cst_38 = arith.constant dense<0.000000e+00> : vector<8x256xf32>
    %60 = tpu.matmul %59, %57, %cst_38 {dimension_numbers = #tpu.dot_dimension_numbers<[1], [0], [0], [1], [0, 0, 1, 1], [], []>} : vector<8x2xf32>, vector<2x256xf32>, vector<8x256xf32> -> vector<8x256xf32>
    %61 = arith.addf %52, %60 : vector<8x256xf32>
    %c16_i32 = arith.constant 16 : i32
    %62 = tpu.dynamic_rotate %46 by %c16_i32 dim 1 : vector<2x256xf32>, i32 -> vector<2x256xf32>
    %c1 = arith.constant 1 : index
    %c0_39 = arith.constant 0 : index
    %c0_40 = arith.constant 0 : index
    %63 = vector.load %arg9[%c1, %c0_39, %c0_40] : memref<9x1x256xf32, #tpu.memory_space<vmem>>, vector<1x1x256xf32>
    %64 = vector.shape_cast %63 : vector<1x1x256xf32> to vector<1x256xf32>
    %65 = vector.broadcast %64 : vector<1x256xf32> to vector<2x256xf32>
    %66 = arith.mulf %62, %65 : vector<2x256xf32>
    %c1_41 = arith.constant 1 : index
    %c0_42 = arith.constant 0 : index
    %c0_43 = arith.constant 0 : index
    %67 = vector.load %arg8[%c1_41, %c0_42, %c0_43] : memref<9x8x2xf32, #tpu.memory_space<vmem>>, vector<1x8x2xf32>
    %68 = vector.shape_cast %67 : vector<1x8x2xf32> to vector<8x2xf32>
    %cst_44 = arith.constant dense<0.000000e+00> : vector<8x256xf32>
    %69 = tpu.matmul %68, %66, %cst_44 {dimension_numbers = #tpu.dot_dimension_numbers<[1], [0], [0], [1], [0, 0, 1, 1], [], []>} : vector<8x2xf32>, vector<2x256xf32>, vector<8x256xf32> -> vector<8x256xf32>
    %70 = arith.addf %61, %69 : vector<8x256xf32>
    %c15_i32 = arith.constant 15 : i32
    %71 = tpu.dynamic_rotate %46 by %c15_i32 dim 1 : vector<2x256xf32>, i32 -> vector<2x256xf32>
    %c2 = arith.constant 2 : index
    %c0_45 = arith.constant 0 : index
    %c0_46 = arith.constant 0 : index
    %72 = vector.load %arg9[%c2, %c0_45, %c0_46] : memref<9x1x256xf32, #tpu.memory_space<vmem>>, vector<1x1x256xf32>
    %73 = vector.shape_cast %72 : vector<1x1x256xf32> to vector<1x256xf32>
    %74 = vector.broadcast %73 : vector<1x256xf32> to vector<2x256xf32>
    %75 = arith.mulf %71, %74 : vector<2x256xf32>
    %c2_47 = arith.constant 2 : index
    %c0_48 = arith.constant 0 : index
    %c0_49 = arith.constant 0 : index
    %76 = vector.load %arg8[%c2_47, %c0_48, %c0_49] : memref<9x8x2xf32, #tpu.memory_space<vmem>>, vector<1x8x2xf32>
    %77 = vector.shape_cast %76 : vector<1x8x2xf32> to vector<8x2xf32>
    %cst_50 = arith.constant dense<0.000000e+00> : vector<8x256xf32>
    %78 = tpu.matmul %77, %75, %cst_50 {dimension_numbers = #tpu.dot_dimension_numbers<[1], [0], [0], [1], [0, 0, 1, 1], [], []>} : vector<8x2xf32>, vector<2x256xf32>, vector<8x256xf32> -> vector<8x256xf32>
    %79 = arith.addf %70, %78 : vector<8x256xf32>
    %c1_i32 = arith.constant 1 : i32
    %80 = tpu.dynamic_rotate %46 by %c1_i32 dim 1 : vector<2x256xf32>, i32 -> vector<2x256xf32>
    %c3 = arith.constant 3 : index
    %c0_51 = arith.constant 0 : index
    %c0_52 = arith.constant 0 : index
    %81 = vector.load %arg9[%c3, %c0_51, %c0_52] : memref<9x1x256xf32, #tpu.memory_space<vmem>>, vector<1x1x256xf32>
    %82 = vector.shape_cast %81 : vector<1x1x256xf32> to vector<1x256xf32>
    %83 = vector.broadcast %82 : vector<1x256xf32> to vector<2x256xf32>
    %84 = arith.mulf %80, %83 : vector<2x256xf32>
    %c3_53 = arith.constant 3 : index
    %c0_54 = arith.constant 0 : index
    %c0_55 = arith.constant 0 : index
    %85 = vector.load %arg8[%c3_53, %c0_54, %c0_55] : memref<9x8x2xf32, #tpu.memory_space<vmem>>, vector<1x8x2xf32>
    %86 = vector.shape_cast %85 : vector<1x8x2xf32> to vector<8x2xf32>
    %cst_56 = arith.constant dense<0.000000e+00> : vector<8x256xf32>
    %87 = tpu.matmul %86, %84, %cst_56 {dimension_numbers = #tpu.dot_dimension_numbers<[1], [0], [0], [1], [0, 0, 1, 1], [], []>} : vector<8x2xf32>, vector<2x256xf32>, vector<8x256xf32> -> vector<8x256xf32>
    %88 = arith.addf %79, %87 : vector<8x256xf32>
    %c255_i32 = arith.constant 255 : i32
    %89 = tpu.dynamic_rotate %46 by %c255_i32 dim 1 : vector<2x256xf32>, i32 -> vector<2x256xf32>
    %c5 = arith.constant 5 : index
    %c0_57 = arith.constant 0 : index
    %c0_58 = arith.constant 0 : index
    %90 = vector.load %arg9[%c5, %c0_57, %c0_58] : memref<9x1x256xf32, #tpu.memory_space<vmem>>, vector<1x1x256xf32>
    %91 = vector.shape_cast %90 : vector<1x1x256xf32> to vector<1x256xf32>
    %92 = vector.broadcast %91 : vector<1x256xf32> to vector<2x256xf32>
    %93 = arith.mulf %89, %92 : vector<2x256xf32>
    %c5_59 = arith.constant 5 : index
    %c0_60 = arith.constant 0 : index
    %c0_61 = arith.constant 0 : index
    %94 = vector.load %arg8[%c5_59, %c0_60, %c0_61] : memref<9x8x2xf32, #tpu.memory_space<vmem>>, vector<1x8x2xf32>
    %95 = vector.shape_cast %94 : vector<1x8x2xf32> to vector<8x2xf32>
    %cst_62 = arith.constant dense<0.000000e+00> : vector<8x256xf32>
    %96 = tpu.matmul %95, %93, %cst_62 {dimension_numbers = #tpu.dot_dimension_numbers<[1], [0], [0], [1], [0, 0, 1, 1], [], []>} : vector<8x2xf32>, vector<2x256xf32>, vector<8x256xf32> -> vector<8x256xf32>
    %97 = arith.addf %88, %96 : vector<8x256xf32>
    %c241_i32 = arith.constant 241 : i32
    %98 = tpu.dynamic_rotate %46 by %c241_i32 dim 1 : vector<2x256xf32>, i32 -> vector<2x256xf32>
    %c6 = arith.constant 6 : index
    %c0_63 = arith.constant 0 : index
    %c0_64 = arith.constant 0 : index
    %99 = vector.load %arg9[%c6, %c0_63, %c0_64] : memref<9x1x256xf32, #tpu.memory_space<vmem>>, vector<1x1x256xf32>
    %100 = vector.shape_cast %99 : vector<1x1x256xf32> to vector<1x256xf32>
    %101 = vector.broadcast %100 : vector<1x256xf32> to vector<2x256xf32>
    %102 = arith.mulf %98, %101 : vector<2x256xf32>
    %c6_65 = arith.constant 6 : index
    %c0_66 = arith.constant 0 : index
    %c0_67 = arith.constant 0 : index
    %103 = vector.load %arg8[%c6_65, %c0_66, %c0_67] : memref<9x8x2xf32, #tpu.memory_space<vmem>>, vector<1x8x2xf32>
    %104 = vector.shape_cast %103 : vector<1x8x2xf32> to vector<8x2xf32>
    %cst_68 = arith.constant dense<0.000000e+00> : vector<8x256xf32>
    %105 = tpu.matmul %104, %102, %cst_68 {dimension_numbers = #tpu.dot_dimension_numbers<[1], [0], [0], [1], [0, 0, 1, 1], [], []>} : vector<8x2xf32>, vector<2x256xf32>, vector<8x256xf32> -> vector<8x256xf32>
    %106 = arith.addf %97, %105 : vector<8x256xf32>
    %c240_i32 = arith.constant 240 : i32
    %107 = tpu.dynamic_rotate %46 by %c240_i32 dim 1 : vector<2x256xf32>, i32 -> vector<2x256xf32>
    %c7 = arith.constant 7 : index
    %c0_69 = arith.constant 0 : index
    %c0_70 = arith.constant 0 : index
    %108 = vector.load %arg9[%c7, %c0_69, %c0_70] : memref<9x1x256xf32, #tpu.memory_space<vmem>>, vector<1x1x256xf32>
    %109 = vector.shape_cast %108 : vector<1x1x256xf32> to vector<1x256xf32>
    %110 = vector.broadcast %109 : vector<1x256xf32> to vector<2x256xf32>
    %111 = arith.mulf %107, %110 : vector<2x256xf32>
    %c7_71 = arith.constant 7 : index
    %c0_72 = arith.constant 0 : index
    %c0_73 = arith.constant 0 : index
    %112 = vector.load %arg8[%c7_71, %c0_72, %c0_73] : memref<9x8x2xf32, #tpu.memory_space<vmem>>, vector<1x8x2xf32>
    %113 = vector.shape_cast %112 : vector<1x8x2xf32> to vector<8x2xf32>
    %cst_74 = arith.constant dense<0.000000e+00> : vector<8x256xf32>
    %114 = tpu.matmul %113, %111, %cst_74 {dimension_numbers = #tpu.dot_dimension_numbers<[1], [0], [0], [1], [0, 0, 1, 1], [], []>} : vector<8x2xf32>, vector<2x256xf32>, vector<8x256xf32> -> vector<8x256xf32>
    %115 = arith.addf %106, %114 : vector<8x256xf32>
    %c239_i32 = arith.constant 239 : i32
    %116 = tpu.dynamic_rotate %46 by %c239_i32 dim 1 : vector<2x256xf32>, i32 -> vector<2x256xf32>
    %c8 = arith.constant 8 : index
    %c0_75 = arith.constant 0 : index
    %c0_76 = arith.constant 0 : index
    %117 = vector.load %arg9[%c8, %c0_75, %c0_76] : memref<9x1x256xf32, #tpu.memory_space<vmem>>, vector<1x1x256xf32>
    %118 = vector.shape_cast %117 : vector<1x1x256xf32> to vector<1x256xf32>
    %119 = vector.broadcast %118 : vector<1x256xf32> to vector<2x256xf32>
    %120 = arith.mulf %116, %119 : vector<2x256xf32>
    %c8_77 = arith.constant 8 : index
    %c0_78 = arith.constant 0 : index
    %c0_79 = arith.constant 0 : index
    %121 = vector.load %arg8[%c8_77, %c0_78, %c0_79] : memref<9x8x2xf32, #tpu.memory_space<vmem>>, vector<1x8x2xf32>
    %122 = vector.shape_cast %121 : vector<1x8x2xf32> to vector<8x2xf32>
    %cst_80 = arith.constant dense<0.000000e+00> : vector<8x256xf32>
    %123 = tpu.matmul %122, %120, %cst_80 {dimension_numbers = #tpu.dot_dimension_numbers<[1], [0], [0], [1], [0, 0, 1, 1], [], []>} : vector<8x2xf32>, vector<2x256xf32>, vector<8x256xf32> -> vector<8x256xf32>
    %124 = arith.addf %115, %123 : vector<8x256xf32>
    %cst_81 = arith.constant dense<0.000000e+00> : vector<8x256xf32>
    %125 = tpu.matmul %7, %47, %cst_81 {dimension_numbers = #tpu.dot_dimension_numbers<[1], [0], [0], [1], [0, 0, 1, 1], [], []>} : vector<8x2xf32>, vector<2x256xf32>, vector<8x256xf32> -> vector<8x256xf32>
    %cst_82 = arith.constant dense<0.000000e+00> : vector<8xf32>
    %126 = vector.multi_reduction <add>, %124, %cst_82 [1] : vector<8x256xf32> to vector<8xf32>
    %127 = vector.shape_cast %126 : vector<8xf32> to vector<8x1xf32>
    %cst_83 = arith.constant 3.906250e-03 : f32
    %128 = vector.broadcast %cst_83 : f32 to vector<8x1xf32>
    %129 = arith.mulf %127, %128 : vector<8x1xf32>
    %cst_84 = arith.constant dense<0.000000e+00> : vector<8xf32>
    %130 = vector.multi_reduction <add>, %125, %cst_84 [1] : vector<8x256xf32> to vector<8xf32>
    %131 = vector.shape_cast %130 : vector<8xf32> to vector<8x1xf32>
    %cst_85 = arith.constant 3.906250e-03 : f32
    %132 = vector.broadcast %cst_85 : f32 to vector<8x1xf32>
    %133 = arith.mulf %131, %132 : vector<8x1xf32>
    %cst_86 = arith.constant dense<0xFF800000> : vector<1xf32>
    %134 = vector.multi_reduction <maximumf>, %129, %cst_86 [0] : vector<8x1xf32> to vector<1xf32>
    %135 = vector.shape_cast %134 : vector<1xf32> to vector<1x1xf32>
    %cst_87 = arith.constant dense<0xFF800000> : vector<1xf32>
    %136 = vector.multi_reduction <maximumf>, %133, %cst_87 [0] : vector<8x1xf32> to vector<1xf32>
    %137 = vector.shape_cast %136 : vector<1xf32> to vector<1x1xf32>
    %138 = arith.maximumf %135, %137 : vector<1x1xf32>
    %139 = vector.broadcast %138 : vector<1x1xf32> to vector<8x1xf32>
    %140 = arith.subf %129, %139 : vector<8x1xf32>
    %141 = math.exp %140 : vector<8x1xf32>
    %142 = vector.broadcast %138 : vector<1x1xf32> to vector<8x1xf32>
    %143 = arith.subf %133, %142 : vector<8x1xf32>
    %144 = math.exp %143 : vector<8x1xf32>
    %cst_88 = arith.constant dense<0.000000e+00> : vector<1xf32>
    %145 = vector.multi_reduction <add>, %141, %cst_88 [0] : vector<8x1xf32> to vector<1xf32>
    %146 = vector.shape_cast %145 : vector<1xf32> to vector<1x1xf32>
    %cst_89 = arith.constant dense<0.000000e+00> : vector<1xf32>
    %147 = vector.multi_reduction <add>, %144, %cst_89 [0] : vector<8x1xf32> to vector<1xf32>
    %148 = vector.shape_cast %147 : vector<1xf32> to vector<1x1xf32>
    %149 = arith.addf %146, %148 : vector<1x1xf32>
    %cst_90 = arith.constant 1.000000e+00 : f32
    %150 = vector.broadcast %cst_90 : f32 to vector<1x1xf32>
    %151 = arith.divf %150, %149 : vector<1x1xf32>
    %152 = vector.broadcast %151 : vector<1x1xf32> to vector<8x1xf32>
    %153 = arith.mulf %141, %152 : vector<8x1xf32>
    %154 = vector.broadcast %153 : vector<8x1xf32> to vector<8x256xf32>
    %155 = arith.mulf %154, %124 : vector<8x256xf32>
    %156 = vector.broadcast %151 : vector<1x1xf32> to vector<8x1xf32>
    %157 = arith.mulf %144, %156 : vector<8x1xf32>
    %158 = vector.broadcast %157 : vector<8x1xf32> to vector<8x256xf32>
    %159 = arith.mulf %158, %125 : vector<8x256xf32>
    %160 = arith.addf %155, %159 : vector<8x256xf32>
    %c0_91 = arith.constant 0 : index
    %c0_92 = arith.constant 0 : index
    %c0_93 = arith.constant 0 : index
    %161 = vector.load %arg12[%c0_91, %c0_92, %c0_93] : memref<1x8x256xf32, #tpu.memory_space<vmem>>, vector<1x8x256xf32>
    %162 = vector.shape_cast %161 : vector<1x8x256xf32> to vector<8x256xf32>
    %163 = vector.shape_cast %160 : vector<8x256xf32> to vector<1x8x256xf32>
    tpu.vector_store %arg12[%c0_91, %c0_92, %c0_93], %163 {strides = array<i32>} : memref<1x8x256xf32, #tpu.memory_space<vmem>>, vector<1x8x256xf32>,
    return
  }
  func.func @transform_0(%arg0: i32) -> (i32, i32, i32) {
    %c0_i32 = arith.constant 0 : i32
    %c0_i32_0 = arith.constant 0 : i32
    %c0_i32_1 = arith.constant 0 : i32
    return %arg0, %c0_i32, %c0_i32_0 : i32, i32, i32
  }
  func.func @transform_1(%arg0: i32) -> (i32, i32) {
    %c0_i32 = arith.constant 0 : i32
    %c0_i32_0 = arith.constant 0 : i32
    %c0_i32_1 = arith.constant 0 : i32
    return %c0_i32, %c0_i32_0 : i32, i32
  }
  func.func @transform_2(%arg0: i32) -> (i32, i32) {
    %c0_i32 = arith.constant 0 : i32
    %c0_i32_0 = arith.constant 0 : i32
    %c0_i32_1 = arith.constant 0 : i32
    return %c0_i32, %c0_i32_0 : i32, i32
  }
  func.func @transform_3(%arg0: i32) -> (i32, i32) {
    %c0_i32 = arith.constant 0 : i32
    %c0_i32_0 = arith.constant 0 : i32
    %c0_i32_1 = arith.constant 0 : i32
    return %c0_i32, %c0_i32_0 : i32, i32
  }
  func.func @transform_4(%arg0: i32) -> (i32, i32) {
    %c0_i32 = arith.constant 0 : i32
    %c0_i32_0 = arith.constant 0 : i32
    %c0_i32_1 = arith.constant 0 : i32
    return %c0_i32, %c0_i32_0 : i32, i32
  }
  func.func @transform_5(%arg0: i32) -> (i32, i32) {
    %c0_i32 = arith.constant 0 : i32
    %c0_i32_0 = arith.constant 0 : i32
    %c0_i32_1 = arith.constant 0 : i32
    return %c0_i32, %c0_i32_0 : i32, i32
  }
  func.func @transform_6(%arg0: i32) -> (i32, i32) {
    %c0_i32 = arith.constant 0 : i32
    %c0_i32_0 = arith.constant 0 : i32
    %c0_i32_1 = arith.constant 0 : i32
    return %c0_i32, %c0_i32_0 : i32, i32
  }
  func.func @transform_7(%arg0: i32) -> (i32, i32, i32) {
    %c0_i32 = arith.constant 0 : i32
    %c0_i32_0 = arith.constant 0 : i32
    %c0_i32_1 = arith.constant 0 : i32
    %c0_i32_2 = arith.constant 0 : i32
    return %c0_i32, %c0_i32_0, %c0_i32_1 : i32, i32, i32
  }
  func.func @transform_8(%arg0: i32) -> (i32, i32, i32) {
    %c0_i32 = arith.constant 0 : i32
    %c0_i32_0 = arith.constant 0 : i32
    %c0_i32_1 = arith.constant 0 : i32
    %c0_i32_2 = arith.constant 0 : i32
    return %c0_i32, %c0_i32_0, %c0_i32_1 : i32, i32, i32
  }
  func.func @transform_9(%arg0: i32) -> (i32, i32) {
    %c0_i32 = arith.constant 0 : i32
    %c0_i32_0 = arith.constant 0 : i32
    %c0_i32_1 = arith.constant 0 : i32
    return %c0_i32, %c0_i32_0 : i32, i32
  }
  func.func @transform_10(%arg0: i32) -> (i32, i32) {
    %c0_i32 = arith.constant 0 : i32
    %c0_i32_0 = arith.constant 0 : i32
    %c0_i32_1 = arith.constant 0 : i32
    return %c0_i32, %c0_i32_0 : i32, i32
  }
  func.func @transform_11(%arg0: i32) -> (i32, i32, i32) {
    %c0_i32 = arith.constant 0 : i32
    %c0_i32_0 = arith.constant 0 : i32
    %c0_i32_1 = arith.constant 0 : i32
    return %arg0, %c0_i32, %c0_i32_0 : i32, i32, i32
  }
}

</mosaic_0001>

<llo_original>
// kernel: tpu_custom_call.1
$region0: #{tpu_custom_call.1}
  #allocation0 [shape = 'u32[]', space=smem, size = 0x4, offset = 0x4, fixed_abs, tag = 'smem constant byte address 0x4 - core index']
  #allocation1 [shape = 'u32[144,128]{1,0:T(1,128)}', space=vmem, size = 0x12000, scoped, tag = 'internal scratch']
  %s0 = inlined_call_operand.vmem [shape: f32[2,8,256], index: 0, kind: input, shape index: {}]
  %s1 = inlined_call_operand.vmem [shape: f32[8,1], index: 1, kind: input, shape index: {}]
  %s2 = inlined_call_operand.vmem [shape: f32[8,1], index: 2, kind: input, shape index: {}]
  %s3 = inlined_call_operand.vmem [shape: f32[8,1], index: 3, kind: input, shape index: {}]
  %s4 = inlined_call_operand.vmem [shape: f32[8,8], index: 4, kind: input, shape index: {}]
  %s5 = inlined_call_operand.vmem [shape: f32[2,8], index: 5, kind: input, shape index: {}]
  %s6 = inlined_call_operand.vmem [shape: f32[2,8], index: 6, kind: input, shape index: {}]
  %s7 = inlined_call_operand.vmem [shape: f32[9,8,2], index: 7, kind: input, shape index: {}]
  %s8 = inlined_call_operand.vmem [shape: f32[9,1,256], index: 8, kind: input, shape index: {}]
  %s9 = inlined_call_operand.vmem [shape: f32[8,1], index: 9, kind: input, shape index: {}]
  %s10 = inlined_call_operand.vmem [shape: f32[8,2], index: 10, kind: input, shape index: {}]
  %s11 = inlined_call_operand.hbm [shape: f32[2,8,256], index: 11, kind: output, shape index: {}]
  %s12 = sld [smem:[#allocation0]]
  $region77: #{tpu_custom_call.1} parent=0
    _
  %s14 = ssub.s32 1, %s12
  %s15 = scalar_select 0, %s14, %s12
  $region1: #{tpu_custom_call.1} parent=0
    #allocation2 [shape = 'u8[16384]{0}', space=vmem, size = 0x4000, scoped, tag = 'output window, operand 0']
    #allocation3 [shape = 's32[2]{0}', space=sflag, size = 0x8, scoped, tag = 'scoped memory for tpu_custom_call.1']
    %16 = vsyncpa [#allocation3], 0
    %s17 = scalar_lea.sflag [#allocation3], 1
    %18 = vsyncpa %s17, 0
    loop: start=0, step=1, limit=4
    $region2: #{tpu_custom_call.1} parent=1 // loop_pre_header
      _
    $region3: #{tpu_custom_call.1} parent=1 // loop_header
      %s20 = sphi 0, %s24
      %p21 = scmp.ge.s32.totalorder %s20, 4
      %s30 = sphi 0, %s32
      %s33 = sphi 0, %s30
      %s34 = sphi 0, %s33
      %s50 = sphi 0, %s34
      %s54 = sphi 0, %s54
      %s56 = sphi 0, %s54
      %s57 = sphi 0, %s56
      %s71 = sphi 0, %s57
      %s75 = sphi 0, %s75
      %s77 = sphi 0, %s75
      %s78 = sphi 0, %s77
      %s92 = sphi 0, %s78
      %s96 = sphi 0, %s96
      %s98 = sphi 0, %s96
      %s99 = sphi 0, %s98
      %s113 = sphi 0, %s99
      %s117 = sphi 0, %s117
      %s119 = sphi 0, %s117
      %s120 = sphi 0, %s119
      %s134 = sphi 0, %s120
      %s138 = sphi 0, %s138
      %s140 = sphi 0, %s138
      %s141 = sphi 0, %s140
      %s155 = sphi 0, %s141
      %s159 = sphi 0, %s159
      %s161 = sphi 0, %s159
      %s162 = sphi 0, %s161
      %s176 = sphi 0, %s162
      %s180 = sphi 0, %s180
      %s182 = sphi 0, %s180
      %s183 = sphi 0, %s182
      %s197 = sphi 0, %s183
      %s201 = sphi 0, %s201
      %s203 = sphi 0, %s201
      %s204 = sphi 0, %s203
      %s218 = sphi 0, %s204
      %s222 = sphi 0, %s222
      %s224 = sphi 0, %s222
      %s225 = sphi 0, %s224
      %s239 = sphi 0, %s225
      %s243 = sphi 0, %s243
      %s245 = sphi 0, %s243
      %s246 = sphi 0, %s245
      %s260 = sphi 0, %s246
      %s266 = sphi 0, %s268
      %s269 = sphi 0, %s266
      %s270 = sphi 0, %s269
      %s286 = sphi 0, %s270
    $region4: #{tpu_custom_call.1} parent=1 // loop_header_branch
      %23 = sbr.rel (%p21) target = $region8
    $region5: #{tpu_custom_call.1} parent=1 // loop_body
      %s25 = ssub.s32 %s20, 1
      %s26 = ssub.s32 %s20, 2
      %s27 = sadd.s32 %s20, 1
      %s28 = ssub.s32 %s20, %s27
      %p29 = scmp.eq.s32.totalorder %s28, 0
      %s31 = sadd.s32 %s30, 1
      %s32 = scalar_select %p29, %s30, %s31
      %p35 = pneg %p29
      %p36 = scmp.eq.s32.totalorder %s20, 1
      %p37 = por %p35, %p36
      %p38 = scmp.ne.s32.totalorder %s30, %s33
      %p39 = scmp.eq.s32.totalorder %s20, 0
      %p40 = por %p38, %p39
      %p41 = scmp.ne.s32.totalorder %s30, %s33
      %p42 = scmp.eq.s32.totalorder %s25, 1
      %p43 = por %p41, %p42
      %p44 = scmp.ne.s32.totalorder %s33, %s34
      %p45 = scmp.eq.s32.totalorder %s25, 0
      %p46 = por %p44, %p45
      %p47 = scmp.ne.s32.totalorder %s33, %s34
      %p48 = scmp.eq.s32.totalorder %s26, 1
      %p49 = por %p47, %p48
      %p51 = scmp.ne.s32.totalorder %s34, %s50
      %p52 = scmp.eq.s32.totalorder %s26, 0
      %p53 = por %p51, %p52
      %s55 = sadd.s32 %s54, 1
      %p58 = scmp.eq.s32.totalorder %s20, 1
      %p59 = scmp.ne.s32.totalorder %s54, %s56
      %p60 = scmp.eq.s32.totalorder %s20, 0
      %p61 = por %p59, %p60
      %p62 = scmp.ne.s32.totalorder %s54, %s56
      %p63 = scmp.eq.s32.totalorder %s25, 1
      %p64 = por %p62, %p63
      %p65 = scmp.ne.s32.totalorder %s56, %s57
      %p66 = scmp.eq.s32.totalorder %s25, 0
      %p67 = por %p65, %p66
      %p68 = scmp.ne.s32.totalorder %s56, %s57
      %p69 = scmp.eq.s32.totalorder %s26, 1
      %p70 = por %p68, %p69
      %p72 = scmp.ne.s32.totalorder %s57, %s71
      %p73 = scmp.eq.s32.totalorder %s26, 0
      %p74 = por %p72, %p73
      %s76 = sadd.s32 %s75, 1
      %p79 = scmp.eq.s32.totalorder %s20, 1
      %p80 = scmp.ne.s32.totalorder %s75, %s77
      %p81 = scmp.eq.s32.totalorder %s20, 0
      %p82 = por %p80, %p81
      %p83 = scmp.ne.s32.totalorder %s75, %s77
      %p84 = scmp.eq.s32.totalorder %s25, 1
      %p85 = por %p83, %p84
      %p86 = scmp.ne.s32.totalorder %s77, %s78
      %p87 = scmp.eq.s32.totalorder %s25, 0
      %p88 = por %p86, %p87
      %p89 = scmp.ne.s32.totalorder %s77, %s78
      %p90 = scmp.eq.s32.totalorder %s26, 1
      %p91 = por %p89, %p90
      %p93 = scmp.ne.s32.totalorder %s78, %s92
      %p94 = scmp.eq.s32.totalorder %s26, 0
      %p95 = por %p93, %p94
      %s97 = sadd.s32 %s96, 1
      %p100 = scmp.eq.s32.totalorder %s20, 1
      %p101 = scmp.ne.s32.totalorder %s96, %s98
      %p102 = scmp.eq.s32.totalorder %s20, 0
      %p103 = por %p101, %p102
      %p104 = scmp.ne.s32.totalorder %s96, %s98
      %p105 = scmp.eq.s32.totalorder %s25, 1
      %p106 = por %p104, %p105
      %p107 = scmp.ne.s32.totalorder %s98, %s99
      %p108 = scmp.eq.s32.totalorder %s25, 0
      %p109 = por %p107, %p108
      %p110 = scmp.ne.s32.totalorder %s98, %s99
      %p111 = scmp.eq.s32.totalorder %s26, 1
      %p112 = por %p110, %p111
      %p114 = scmp.ne.s32.totalorder %s99, %s113
      %p115 = scmp.eq.s32.totalorder %s26, 0
      %p116 = por %p114, %p115
      %s118 = sadd.s32 %s117, 1
      %p121 = scmp.eq.s32.totalorder %s20, 1
      %p122 = scmp.ne.s32.totalorder %s117, %s119
      %p123 = scmp.eq.s32.totalorder %s20, 0
      %p124 = por %p122, %p123
      %p125 = scmp.ne.s32.totalorder %s117, %s119
      %p126 = scmp.eq.s32.totalorder %s25, 1
      %p127 = por %p125, %p126
      %p128 = scmp.ne.s32.totalorder %s119, %s120
      %p129 = scmp.eq.s32.totalorder %s25, 0
      %p130 = por %p128, %p129
      %p131 = scmp.ne.s32.totalorder %s119, %s120
      %p132 = scmp.eq.s32.totalorder %s26, 1
      %p133 = por %p131, %p132
      %p135 = scmp.ne.s32.totalorder %s120, %s134
      %p136 = scmp.eq.s32.totalorder %s26, 0
      %p137 = por %p135, %p136
      %s139 = sadd.s32 %s138, 1
      %p142 = scmp.eq.s32.totalorder %s20, 1
      %p143 = scmp.ne.s32.totalorder %s138, %s140
      %p144 = scmp.eq.s32.totalorder %s20, 0
      %p145 = por %p143, %p144
      %p146 = scmp.ne.s32.totalorder %s138, %s140
      %p147 = scmp.eq.s32.totalorder %s25, 1
      %p148 = por %p146, %p147
      %p149 = scmp.ne.s32.totalorder %s140, %s141
      %p150 = scmp.eq.s32.totalorder %s25, 0
      %p151 = por %p149, %p150
      %p152 = scmp.ne.s32.totalorder %s140, %s141
      %p153 = scmp.eq.s32.totalorder %s26, 1
      %p154 = por %p152, %p153
      %p156 = scmp.ne.s32.totalorder %s141, %s155
      %p157 = scmp.eq.s32.totalorder %s26, 0
      %p158 = por %p156, %p157
      %s160 = sadd.s32 %s159, 1
      %p163 = scmp.eq.s32.totalorder %s20, 1
      %p164 = scmp.ne.s32.totalorder %s159, %s161
      %p165 = scmp.eq.s32.totalorder %s20, 0
      %p166 = por %p164, %p165
      %p167 = scmp.ne.s32.totalorder %s159, %s161
      %p168 = scmp.eq.s32.totalorder %s25, 1
      %p169 = por %p167, %p168
      %p170 = scmp.ne.s32.totalorder %s161, %s162
      %p171 = scmp.eq.s32.totalorder %s25, 0
      %p172 = por %p170, %p171
      %p173 = scmp.ne.s32.totalorder %s161, %s162
      %p174 = scmp.eq.s32.totalorder %s26, 1
      %p175 = por %p173, %p174
      %p177 = scmp.ne.s32.totalorder %s162, %s176
      %p178 = scmp.eq.s32.totalorder %s26, 0
      %p179 = por %p177, %p178
      %s181 = sadd.s32 %s180, 1
      %p184 = scmp.eq.s32.totalorder %s20, 1
      %p185 = scmp.ne.s32.totalorder %s180, %s182
      %p186 = scmp.eq.s32.totalorder %s20, 0
      %p187 = por %p185, %p186
      %p188 = scmp.ne.s32.totalorder %s180, %s182
      %p189 = scmp.eq.s32.totalorder %s25, 1
      %p190 = por %p188, %p189
      %p191 = scmp.ne.s32.totalorder %s182, %s183
      %p192 = scmp.eq.s32.totalorder %s25, 0
      %p193 = por %p191, %p192
      %p194 = scmp.ne.s32.totalorder %s182, %s183
      %p195 = scmp.eq.s32.totalorder %s26, 1
      %p196 = por %p194, %p195
      %p198 = scmp.ne.s32.totalorder %s183, %s197
      %p199 = scmp.eq.s32.totalorder %s26, 0
      %p200 = por %p198, %p199
      %s202 = sadd.s32 %s201, 1
      %p205 = scmp.eq.s32.totalorder %s20, 1
      %p206 = scmp.ne.s32.totalorder %s201, %s203
      %p207 = scmp.eq.s32.totalorder %s20, 0
      %p208 = por %p206, %p207
      %p209 = scmp.ne.s32.totalorder %s201, %s203
      %p210 = scmp.eq.s32.totalorder %s25, 1
      %p211 = por %p209, %p210
      %p212 = scmp.ne.s32.totalorder %s203, %s204
      %p213 = scmp.eq.s32.totalorder %s25, 0
      %p214 = por %p212, %p213
      %p215 = scmp.ne.s32.totalorder %s203, %s204
      %p216 = scmp.eq.s32.totalorder %s26, 1
      %p217 = por %p215, %p216
      %p219 = scmp.ne.s32.totalorder %s204, %s218
      %p220 = scmp.eq.s32.totalorder %s26, 0
      %p221 = por %p219, %p220
      %s223 = sadd.s32 %s222, 1
      %p226 = scmp.eq.s32.totalorder %s20, 1
      %p227 = scmp.ne.s32.totalorder %s222, %s224
      %p228 = scmp.eq.s32.totalorder %s20, 0
      %p229 = por %p227, %p228
      %p230 = scmp.ne.s32.totalorder %s222, %s224
      %p231 = scmp.eq.s32.totalorder %s25, 1
      %p232 = por %p230, %p231
      %p233 = scmp.ne.s32.totalorder %s224, %s225
      %p234 = scmp.eq.s32.totalorder %s25, 0
      %p235 = por %p233, %p234
      %p236 = scmp.ne.s32.totalorder %s224, %s225
      %p237 = scmp.eq.s32.totalorder %s26, 1
      %p238 = por %p236, %p237
      %p240 = scmp.ne.s32.totalorder %s225, %s239
      %p241 = scmp.eq.s32.totalorder %s26, 0
      %p242 = por %p240, %p241
      %s244 = sadd.s32 %s243, 1
      %p247 = scmp.eq.s32.totalorder %s20, 1
      %p248 = scmp.ne.s32.totalorder %s243, %s245
      %p249 = scmp.eq.s32.totalorder %s20, 0
      %p250 = por %p248, %p249
      %p251 = scmp.ne.s32.totalorder %s243, %s245
      %p252 = scmp.eq.s32.totalorder %s25, 1
      %p253 = por %p251, %p252
      %p254 = scmp.ne.s32.totalorder %s245, %s246
      %p255 = scmp.eq.s32.totalorder %s25, 0
      %p256 = por %p254, %p255
      %p257 = scmp.ne.s32.totalorder %s245, %s246
      %p258 = scmp.eq.s32.totalorder %s26, 1
      %p259 = por %p257, %p258
      %p261 = scmp.ne.s32.totalorder %s246, %s260
      %p262 = scmp.eq.s32.totalorder %s26, 0
      %p263 = por %p261, %p262
      %s264 = ssub.s32 %s20, %s27
      %p265 = scmp.eq.s32.totalorder %s264, 0
      %s267 = sadd.s32 %s266, 1
      %s268 = scalar_select %p265, %s266, %s267
      %p271 = pneg %p265
      %p272 = scmp.eq.s32.totalorder %s20, 1
      %p273 = por %p271, %p272
      %p274 = scmp.ne.s32.totalorder %s266, %s269
      %p275 = scmp.eq.s32.totalorder %s20, 0
      %p276 = por %p274, %p275
      %p277 = scmp.ne.s32.totalorder %s266, %s269
      %p278 = scmp.eq.s32.totalorder %s25, 1
      %p279 = por %p277, %p278
      %p280 = scmp.ne.s32.totalorder %s269, %s270
      %p281 = scmp.eq.s32.totalorder %s25, 0
      %p282 = por %p280, %p281
      %p283 = scmp.ne.s32.totalorder %s269, %s270
      %p284 = scmp.eq.s32.totalorder %s26, 1
      %p285 = por %p283, %p284
      %p287 = scmp.ne.s32.totalorder %s270, %s286
      %p288 = scmp.eq.s32.totalorder %s26, 0
      %p289 = por %p287, %p288
      %p290 = scmp.le.s32.totalorder 1, %s20
      %p291 = scmp.lt.s32.totalorder %s20, 3
      %p292 = pnand %p290, %p291
      %p293 = pneg %p292
      // Predicated region
      $region9: #{tpu_custom_call.1} parent=5 // pred_check
        _
      $region10: #{tpu_custom_call.1} parent=5 // pred_check_branch
        %295 = sbr.rel (%p292) target = $region12
      $region11: #{tpu_custom_call.1} parent=5 // pred_region
        %s296 = ssub.s32 %s20, 1
        // Predicated region
        $region13: #{tpu_custom_call.1} parent=11 // pred_check
          %p297 = pneg %p67
        $region14: #{tpu_custom_call.1} parent=11 // pred_check_branch
          %299 = sbr.rel (%p297) target = $region16
        $region15: #{tpu_custom_call.1} parent=11 // pred_region
          _
        $region16: #{tpu_custom_call.1} parent=11 // pred_fallthru
          _
        // Predicated region
        $region17: #{tpu_custom_call.1} parent=11 // pred_check
          %p300 = pneg %p88
        $region18: #{tpu_custom_call.1} parent=11 // pred_check_branch
          %302 = sbr.rel (%p300) target = $region20
        $region19: #{tpu_custom_call.1} parent=11 // pred_region
          _
        $region20: #{tpu_custom_call.1} parent=11 // pred_fallthru
          _
        // Predicated region
        $region21: #{tpu_custom_call.1} parent=11 // pred_check
          %p303 = pneg %p109
        $region22: #{tpu_custom_call.1} parent=11 // pred_check_branch
          %305 = sbr.rel (%p303) target = $region24
        $region23: #{tpu_custom_call.1} parent=11 // pred_region
          _
        $region24: #{tpu_custom_call.1} parent=11 // pred_fallthru
          _
        // Predicated region
        $region25: #{tpu_custom_call.1} parent=11 // pred_check
          %p306 = pneg %p130
        $region26: #{tpu_custom_call.1} parent=11 // pred_check_branch
          %308 = sbr.rel (%p306) target = $region28
        $region27: #{tpu_custom_call.1} parent=11 // pred_region
          _
        $region28: #{tpu_custom_call.1} parent=11 // pred_fallthru
          _
        // Predicated region
        $region29: #{tpu_custom_call.1} parent=11 // pred_check
          %p309 = pneg %p151
        $region30: #{tpu_custom_call.1} parent=11 // pred_check_branch
          %311 = sbr.rel (%p309) target = $region32
        $region31: #{tpu_custom_call.1} parent=11 // pred_region
          _
        $region32: #{tpu_custom_call.1} parent=11 // pred_fallthru
          _
        // Predicated region
        $region33: #{tpu_custom_call.1} parent=11 // pred_check
          %p312 = pneg %p172
        $region34: #{tpu_custom_call.1} parent=11 // pred_check_branch
          %314 = sbr.rel (%p312) target = $region36
        $region35: #{tpu_custom_call.1} parent=11 // pred_region
          _
        $region36: #{tpu_custom_call.1} parent=11 // pred_fallthru
          _
        // Predicated region
        $region37: #{tpu_custom_call.1} parent=11 // pred_check
          %p315 = pneg %p193
        $region38: #{tpu_custom_call.1} parent=11 // pred_check_branch
          %317 = sbr.rel (%p315) target = $region40
        $region39: #{tpu_custom_call.1} parent=11 // pred_region
          _
        $region40: #{tpu_custom_call.1} parent=11 // pred_fallthru
          _
        // Predicated region
        $region41: #{tpu_custom_call.1} parent=11 // pred_check
          %p318 = pneg %p214
        $region42: #{tpu_custom_call.1} parent=11 // pred_check_branch
          %320 = sbr.rel (%p318) target = $region44
        $region43: #{tpu_custom_call.1} parent=11 // pred_region
          _
        $region44: #{tpu_custom_call.1} parent=11 // pred_fallthru
          _
        // Predicated region
        $region45: #{tpu_custom_call.1} parent=11 // pred_check
          %p321 = pneg %p235
        $region46: #{tpu_custom_call.1} parent=11 // pred_check_branch
          %323 = sbr.rel (%p321) target = $region48
        $region47: #{tpu_custom_call.1} parent=11 // pred_region
          _
        $region48: #{tpu_custom_call.1} parent=11 // pred_fallthru
          _
        // Predicated region
        $region49: #{tpu_custom_call.1} parent=11 // pred_check
          %p324 = pneg %p256
        $region50: #{tpu_custom_call.1} parent=11 // pred_check_branch
          %326 = sbr.rel (%p324) target = $region52
        $region51: #{tpu_custom_call.1} parent=11 // pred_region
          _
        $region52: #{tpu_custom_call.1} parent=11 // pred_fallthru
          _
      $region12: #{tpu_custom_call.1} parent=5 // pred_fallthru
        _
      %p327 = scmp.lt.s32.totalorder %s20, 2
      // Predicated region
      $region53: #{tpu_custom_call.1} parent=5 // pred_check
        %p328 = pneg %p327
      $region54: #{tpu_custom_call.1} parent=5 // pred_check_branch
        %330 = sbr.rel (%p328) target = $region56
      $region55: #{tpu_custom_call.1} parent=5 // pred_region
        // Predicated region
        $region57: #{tpu_custom_call.1} parent=55 // pred_check
          %p331 = pneg %p40
        $region58: #{tpu_custom_call.1} parent=55 // pred_check_branch
          %333 = sbr.rel (%p331) target = $region60
        $region59: #{tpu_custom_call.1} parent=55 // pred_region
          %p334 = scmp.lt.s32.totalorder %s20, 1
          %s335 = scalar_select %p334, %s20, 1
          %s336 = smul.addr %s335, 2
          %s337 = smul.addr %s336, 8
          %s338 = scalar_lea.vmem %s0, %s337
        $region60: #{tpu_custom_call.1} parent=55 // pred_fallthru
          _
      $region56: #{tpu_custom_call.1} parent=5 // pred_fallthru
        _
      %p339 = scmp.le.s32.totalorder 1, %s20
      %p340 = scmp.lt.s32.totalorder %s20, 3
      %p341 = pnand %p339, %p340
      %p342 = pneg %p341
      // Predicated region
      $region61: #{tpu_custom_call.1} parent=5 // pred_check
        _
      $region62: #{tpu_custom_call.1} parent=5 // pred_check_branch
        %344 = sbr.rel (%p341) target = $region64
      $region63: #{tpu_custom_call.1} parent=5 // pred_region
        %s345 = ssub.s32 %s20, 1
        %p346 = scmp.lt.s32.totalorder %s25, 1
        %s347 = scalar_select %p346, %s25, 1
        %s348 = smul.addr %s347, 2
        %s349 = smul.addr %s348, 8
        %s350 = scalar_lea.vmem %s0, %s349
        %p351 = pneg %p46
        %p352 = pneg %p43
        %p353 = pneg %p67
        %p354 = pneg %p64
        %p355 = pneg %p88
        %p356 = pneg %p85
        %p357 = pneg %p109
        %p358 = pneg %p106
        %p359 = pneg %p130
        %p360 = pneg %p127
        %p361 = pneg %p151
        %p362 = pneg %p148
        %p363 = pneg %p172
        %p364 = pneg %p169
        %p365 = pneg %p193
        %p366 = pneg %p190
        %p367 = pneg %p214
        %p368 = pneg %p211
        %p369 = pneg %p235
        %p370 = pneg %p232
        %p371 = pneg %p256
        %p372 = pneg %p253
        %p373 = pneg %p282
        %p374 = pneg %p279
        %s375 = sand.u32 %s269, 1
        %s376 = scalar_lea.sflag [#allocation3], %s375
        %s377 = sand.u32 %s269, 1
        %s378 = smul.addr %s377, 16
        %s379 = scalar_lea.vmem [#allocation2], %s378
        %p380 = scmp.lt.s32.totalorder %s25, 1
        %s381 = scalar_select %p380, %s25, 1
        %s382 = smul.addr %s381, 2
        %s383 = smul.addr %s382, 8
        %s384 = scalar_lea.vmem %s0, %s383
        %v385 = vld [vmem:[%s1] sm:$0xff]
        %v386 = vld [vmem:[%s2] sm:$0xff]
        %v387 = vld [vmem:[%s3] sm:$0xff]
        %v388 = vld [vmem:[%s4] sm:$0xff]
        %v389 = vld [vmem:[%s5] sm:$0x3]
        %v390 = vld [vmem:[%s6] sm:$0x3]
        %v391 = vld [vmem:[%s9] sm:$0xff]
        %v392 = vld [vmem:[%s10] sm:$0xff]
        %v393 = vld [vmem:[%s384] sm:$0xff]
        %v394 = vld [vmem:[%s384 + $0x8] sm:$0xff]
        %v395 = vadd.f32 %v393, %v394
        %396 = vadd.xlane.f32.xlu0 %v395
        %v397 = vpop.xlane.xlu0 %396
        %vm398 = vcmask 64512
        %v400 = vsel %vm398, %v388, 0
        %402 = vmatprep.subr.mxu0 0.0
        %403 = vmatpush1.msra.mxu0 0.0
        %404 = vmatprep.subr.mxu0 0.0
        %405 = vmatpush1.msra.mxu0 0.0
        %406 = vmatprep.subr.mxu0 0.0
        %407 = vmatpush1.msra.mxu0 0.0
        %408 = vmatprep.subr.mxu0 0.0
        %409 = vmatpush1.msra.mxu0 0.0
        %410 = vmatprep.subr.mxu0 0.0
        %411 = vmatpush1.msra.mxu0 0.0
        %412 = vmatprep.subr.mxu0 0.0
        %413 = vmatpush1.msra.mxu0 0.0
        %414 = vmatprep.subr.mxu0 0.0
        %415 = vmatpush1.msra.mxu0 0.0
        %416 = vmatprep.subr.mxu0 0.0
        %417 = vmatpush1.msra.mxu0 0.0
        %418 = vmatprep.subr.mxu0 0.0
        %419 = vmatpush1.msra.mxu0 0.0
        %420 = vmatprep.subr.mxu0 0.0
        %421 = vmatpush1.msra.mxu0 0.0
        %422 = vmatprep.subr.mxu0 0.0
        %423 = vmatpush1.msra.mxu0 0.0
        %424 = vmatprep.subr.mxu0 0.0
        %425 = vmatpush1.msra.mxu0 0.0
        %426 = vmatprep.subr.mxu0 0.0
        %427 = vmatpush1.msra.mxu0 0.0
        %428 = vmatprep.subr.mxu0 0.0
        %429 = vmatpush1.msra.mxu0 0.0
        %430 = vmatprep.subr.mxu0 0.0
        %431 = vmatpush1.msra.mxu0 0.0
        %432 = vmatprep.subr.mxu0 0.0
        %433 = vmatpush1.msra.mxu0 %v397
        %434 = vmatprep.subr.mxu0 0.0
        %435 = vmatpush2.msra.mxu0 0.0
        %436 = vmatprep.subr.mxu0 0.0
        %437 = vmatpush2.msra.mxu0 0.0
        %438 = vmatprep.subr.mxu0 0.0
        %439 = vmatpush2.msra.mxu0 0.0
        %440 = vmatprep.subr.mxu0 0.0
        %441 = vmatpush2.msra.mxu0 0.0
        %442 = vmatprep.subr.mxu0 0.0
        %443 = vmatpush2.msra.mxu0 0.0
        %444 = vmatprep.subr.mxu0 0.0
        %445 = vmatpush2.msra.mxu0 0.0
        %446 = vmatprep.subr.mxu0 0.0
        %447 = vmatpush2.msra.mxu0 0.0
        %448 = vmatprep.subr.mxu0 0.0
        %449 = vmatpush2.msra.mxu0 0.0
        %450 = vmatprep.subr.mxu0 0.0
        %451 = vmatpush2.msra.mxu0 0.0
        %452 = vmatprep.subr.mxu0 0.0
        %453 = vmatpush2.msra.mxu0 0.0
        %454 = vmatprep.subr.mxu0 0.0
        %455 = vmatpush2.msra.mxu0 0.0
        %456 = vmatprep.subr.mxu0 0.0
        %457 = vmatpush2.msra.mxu0 0.0
        %458 = vmatprep.subr.mxu0 0.0
        %459 = vmatpush2.msra.mxu0 0.0
        %460 = vmatprep.subr.mxu0 0.0
        %461 = vmatpush2.msra.mxu0 0.0
        %462 = vmatprep.subr.mxu0 0.0
        %463 = vmatpush2.msra.mxu0 0.0
        %464 = vmatprep.subr.mxu0 0.0
        %465 = vmatpush2.msra.mxu0 0.0
        %466 = vmatprep.mubr.f32.mxu0 0.0
        %467 = vmatmul.mubr.f32.gmra.mxu0 %v400
        %v468 = vpop.f32.mrf.mxu0
        %v469 = vadd.f32 0.0, %v468
        %v470 = vpop.f32.mrf.mxu0
        %471 = vdwg.mxu0
        %v472 = vmul.f32 %v469, 0.001953125
        %474 = vset.pattern.permute.xlu0 0
        %475 = vperm.xlu0 %474, %v472
        %v476 = vpop.permute.xlu0 %475
        %v478 = vsub.f32 %v393, %v476
        %v479 = vsub.f32 %v394, %v476
        %v480 = vmul.f32 %v478, %v478
        %v481 = vmul.f32 %v479, %v479
        %v482 = vadd.f32 %v480, %v481
        %483 = vadd.xlane.f32.xlu0 %v482
        %v484 = vpop.xlane.xlu0 %483
        %485 = vmatprep.subr.mxu0 0.0
        %486 = vmatpush1.msra.mxu0 0.0
        %487 = vmatprep.subr.mxu0 0.0
        %488 = vmatpush1.msra.mxu0 0.0
        %489 = vmatprep.subr.mxu0 0.0
        %490 = vmatpush1.msra.mxu0 0.0
        %491 = vmatprep.subr.mxu0 0.0
        %492 = vmatpush1.msra.mxu0 0.0
        %493 = vmatprep.subr.mxu0 0.0
        %494 = vmatpush1.msra.mxu0 0.0
        %495 = vmatprep.subr.mxu0 0.0
        %496 = vmatpush1.msra.mxu0 0.0
        %497 = vmatprep.subr.mxu0 0.0
        %498 = vmatpush1.msra.mxu0 0.0
        %499 = vmatprep.subr.mxu0 0.0
        %500 = vmatpush1.msra.mxu0 0.0
        %501 = vmatprep.subr.mxu0 0.0
        %502 = vmatpush1.msra.mxu0 0.0
        %503 = vmatprep.subr.mxu0 0.0
        %504 = vmatpush1.msra.mxu0 0.0
        %505 = vmatprep.subr.mxu0 0.0
        %506 = vmatpush1.msra.mxu0 0.0
        %507 = vmatprep.subr.mxu0 0.0
        %508 = vmatpush1.msra.mxu0 0.0
        %509 = vmatprep.subr.mxu0 0.0
        %510 = vmatpush1.msra.mxu0 0.0
        %511 = vmatprep.subr.mxu0 0.0
        %512 = vmatpush1.msra.mxu0 0.0
        %513 = vmatprep.subr.mxu0 0.0
        %514 = vmatpush1.msra.mxu0 0.0
        %515 = vmatprep.subr.mxu0 0.0
        %516 = vmatpush1.msra.mxu0 %v484
        %517 = vmatprep.subr.mxu0 0.0
        %518 = vmatpush2.msra.mxu0 0.0
        %519 = vmatprep.subr.mxu0 0.0
        %520 = vmatpush2.msra.mxu0 0.0
        %521 = vmatprep.subr.mxu0 0.0
        %522 = vmatpush2.msra.mxu0 0.0
        %523 = vmatprep.subr.mxu0 0.0
        %524 = vmatpush2.msra.mxu0 0.0
        %525 = vmatprep.subr.mxu0 0.0
        %526 = vmatpush2.msra.mxu0 0.0
        %527 = vmatprep.subr.mxu0 0.0
        %528 = vmatpush2.msra.mxu0 0.0
        %529 = vmatprep.subr.mxu0 0.0
        %530 = vmatpush2.msra.mxu0 0.0
        %531 = vmatprep.subr.mxu0 0.0
        %532 = vmatpush2.msra.mxu0 0.0
        %533 = vmatprep.subr.mxu0 0.0
        %534 = vmatpush2.msra.mxu0 0.0
        %535 = vmatprep.subr.mxu0 0.0
        %536 = vmatpush2.msra.mxu0 0.0
        %537 = vmatprep.subr.mxu0 0.0
        %538 = vmatpush2.msra.mxu0 0.0
        %539 = vmatprep.subr.mxu0 0.0
        %540 = vmatpush2.msra.mxu0 0.0
        %541 = vmatprep.subr.mxu0 0.0
        %542 = vmatpush2.msra.mxu0 0.0
        %543 = vmatprep.subr.mxu0 0.0
        %544 = vmatpush2.msra.mxu0 0.0
        %545 = vmatprep.subr.mxu0 0.0
        %546 = vmatpush2.msra.mxu0 0.0
        %547 = vmatprep.subr.mxu0 0.0
        %548 = vmatpush2.msra.mxu0 0.0
        %549 = vmatprep.mubr.f32.mxu0 0.0
        %550 = vmatmul.mubr.f32.gmra.mxu0 %v400
        %v551 = vpop.f32.mrf.mxu0
        %v552 = vadd.f32 0.0, %v551
        %v553 = vpop.f32.mrf.mxu0
        %554 = vdwg.mxu0
        %v555 = vmul.f32 %v552, 0.0019569471
        %v556 = vrsqrt.pop %v555
        %v557 = vmul.f32 %v555, %v556
        %vm558 = vcmp.eq.f32.partialorder %v555, inf
        %v559 = vsel %vm558, %v555, %v557
        %vm560 = vcmp.eq.f32.partialorder %v555, 0.0
        %v561 = vand.u32 %v555, 2147483648
        %v562 = vsel %vm560, %v561, %v559
        %v563 = vadd.f32 %v562, 1e-10
        %565 = vset.pattern.permute.xlu0 0
        %566 = vperm.xlu0 %565, %v563
        %v567 = vpop.permute.xlu0 %566
        %v569 = vrcp.pop %v567
        %v570 = vmul.f32 %v478, %v569
        %v571 = vmul.f32 %v479, %v569
        %573 = vset.pattern.permute.xlu0 0
        %574 = vperm.xlu0 %573, %v385
        %v575 = vpop.permute.xlu0 %574
        %v577 = vmul.f32 %v570, %v575
        %v578 = vmul.f32 %v571, %v575
        %580 = vset.pattern.permute.xlu0 0
        %581 = vperm.xlu0 %580, %v386
        %v582 = vpop.permute.xlu0 %581
        %v584 = vadd.f32 %v577, %v582
        %v585 = vadd.f32 %v578, %v582
        %587 = vset.pattern.permute.xlu0 0
        %588 = vperm.xlu0 %587, %v387
        %v589 = vpop.permute.xlu0 %588
        %v591 = vmul.f32 %v584, %v589
        %v592 = vmul.f32 %v585, %v589
        %v593 = vxor.u32 %v591, 2147483648
        %v594 = vxor.u32 %v592, 2147483648
        %v595 = vmul.f32 %v593, 1.442695
        %v596 = vpow.pop %v595
        %v597 = vmul.f32 %v594, 1.442695
        %v598 = vpow.pop %v597
        %v599 = vadd.f32 %v596, 1.0
        %v600 = vadd.f32 %v598, 1.0
        %v601 = vrcp.pop %v599
        %v602 = vmul.f32 1.0, %v601
        %v603 = vrcp.pop %v600
        %v604 = vmul.f32 1.0, %v603
        %vm605 = vcmp.ge.f32.partialorder %v602, 0.5
        %vm606 = vcmp.ge.f32.partialorder %v604, 0.5
        %v607 = vsel %vm605, %v584, 0.0
        %v608 = vsel %vm606, %v585, 0.0
        %v609 = vsub.f32 %v584, %v607
        %v610 = vsub.f32 %v585, %v608
        %v611 = vrot.slane %v609, 4
        %v612 = vrot.slane %v610, 4
        %v613 = vadd.f32 %v607, %v611
        %v614 = vadd.f32 %v608, %v612
        %v616 = vsel %vm398, %v389, 0
        %618 = vmatprep.subr.mxu0 0.0
        %619 = vmatpush1.msra.mxu0 0.0
        %620 = vmatprep.subr.mxu0 0.0
        %621 = vmatpush1.msra.mxu0 0.0
        %622 = vmatprep.subr.mxu0 0.0
        %623 = vmatpush1.msra.mxu0 0.0
        %624 = vmatprep.subr.mxu0 0.0
        %625 = vmatpush1.msra.mxu0 0.0
        %626 = vmatprep.subr.mxu0 0.0
        %627 = vmatpush1.msra.mxu0 0.0
        %628 = vmatprep.subr.mxu0 0.0
        %629 = vmatpush1.msra.mxu0 0.0
        %630 = vmatprep.subr.mxu0 0.0
        %631 = vmatpush1.msra.mxu0 0.0
        %632 = vmatprep.subr.mxu0 0.0
        %633 = vmatpush1.msra.mxu0 0.0
        %634 = vmatprep.subr.mxu0 0.0
        %635 = vmatpush1.msra.mxu0 0.0
        %636 = vmatprep.subr.mxu0 0.0
        %637 = vmatpush1.msra.mxu0 0.0
        %638 = vmatprep.subr.mxu0 0.0
        %639 = vmatpush1.msra.mxu0 0.0
        %640 = vmatprep.subr.mxu0 0.0
        %641 = vmatpush1.msra.mxu0 0.0
        %642 = vmatprep.subr.mxu0 0.0
        %643 = vmatpush1.msra.mxu0 0.0
        %644 = vmatprep.subr.mxu0 0.0
        %645 = vmatpush1.msra.mxu0 0.0
        %646 = vmatprep.subr.mxu0 0.0
        %647 = vmatpush1.msra.mxu0 0.0
        %648 = vmatprep.subr.mxu0 %v614
        %649 = vmatpush1.msra.mxu0 %v613
        %650 = vmatprep.subr.mxu0 0.0
        %651 = vmatpush2.msra.mxu0 0.0
        %652 = vmatprep.subr.mxu0 0.0
        %653 = vmatpush2.msra.mxu0 0.0
        %654 = vmatprep.subr.mxu0 0.0
        %655 = vmatpush2.msra.mxu0 0.0
        %656 = vmatprep.subr.mxu0 0.0
        %657 = vmatpush2.msra.mxu0 0.0
        %658 = vmatprep.subr.mxu0 0.0
        %659 = vmatpush2.msra.mxu0 0.0
        %660 = vmatprep.subr.mxu0 0.0
        %661 = vmatpush2.msra.mxu0 0.0
        %662 = vmatprep.subr.mxu0 0.0
        %663 = vmatpush2.msra.mxu0 0.0
        %664 = vmatprep.subr.mxu0 0.0
        %665 = vmatpush2.msra.mxu0 0.0
        %666 = vmatprep.subr.mxu0 0.0
        %667 = vmatpush2.msra.mxu0 0.0
        %668 = vmatprep.subr.mxu0 0.0
        %669 = vmatpush2.msra.mxu0 0.0
        %670 = vmatprep.subr.mxu0 0.0
        %671 = vmatpush2.msra.mxu0 0.0
        %672 = vmatprep.subr.mxu0 0.0
        %673 = vmatpush2.msra.mxu0 0.0
        %674 = vmatprep.subr.mxu0 0.0
        %675 = vmatpush2.msra.mxu0 0.0
        %676 = vmatprep.subr.mxu0 0.0
        %677 = vmatpush2.msra.mxu0 0.0
        %678 = vmatprep.subr.mxu0 0.0
        %679 = vmatpush2.msra.mxu0 0.0
        %680 = vmatprep.subr.mxu0 0.0
        %681 = vmatpush2.msra.mxu0 0.0
        %682 = vmatprep.mubr.f32.mxu0 0.0
        %683 = vmatmul.mubr.f32.gmra.mxu0 %v616
        %v684 = vpop.f32.mrf.mxu0
        %v685 = vadd.f32 0.0, %v684
        %v686 = vpop.f32.mrf.mxu0
        %v687 = vadd.f32 0.0, %v686
        %688 = vdwg.mxu0
        %v690 = vsel %vm398, %v390, 0
        %692 = vmatprep.subr.mxu0 0.0
        %693 = vmatpush1.msra.mxu0 0.0
        %694 = vmatprep.subr.mxu0 0.0
        %695 = vmatpush1.msra.mxu0 0.0
        %696 = vmatprep.subr.mxu0 0.0
        %697 = vmatpush1.msra.mxu0 0.0
        %698 = vmatprep.subr.mxu0 0.0
        %699 = vmatpush1.msra.mxu0 0.0
        %700 = vmatprep.subr.mxu0 0.0
        %701 = vmatpush1.msra.mxu0 0.0
        %702 = vmatprep.subr.mxu0 0.0
        %703 = vmatpush1.msra.mxu0 0.0
        %704 = vmatprep.subr.mxu0 0.0
        %705 = vmatpush1.msra.mxu0 0.0
        %706 = vmatprep.subr.mxu0 0.0
        %707 = vmatpush1.msra.mxu0 0.0
        %708 = vmatprep.subr.mxu0 0.0
        %709 = vmatpush1.msra.mxu0 0.0
        %710 = vmatprep.subr.mxu0 0.0
        %711 = vmatpush1.msra.mxu0 0.0
        %712 = vmatprep.subr.mxu0 0.0
        %713 = vmatpush1.msra.mxu0 0.0
        %714 = vmatprep.subr.mxu0 0.0
        %715 = vmatpush1.msra.mxu0 0.0
        %716 = vmatprep.subr.mxu0 0.0
        %717 = vmatpush1.msra.mxu0 0.0
        %718 = vmatprep.subr.mxu0 0.0
        %719 = vmatpush1.msra.mxu0 0.0
        %720 = vmatprep.subr.mxu0 0.0
        %721 = vmatpush1.msra.mxu0 0.0
        %722 = vmatprep.subr.mxu0 %v614
        %723 = vmatpush1.msra.mxu0 %v613
        %724 = vmatprep.subr.mxu0 0.0
        %725 = vmatpush2.msra.mxu0 0.0
        %726 = vmatprep.subr.mxu0 0.0
        %727 = vmatpush2.msra.mxu0 0.0
        %728 = vmatprep.subr.mxu0 0.0
        %729 = vmatpush2.msra.mxu0 0.0
        %730 = vmatprep.subr.mxu0 0.0
        %731 = vmatpush2.msra.mxu0 0.0
        %732 = vmatprep.subr.mxu0 0.0
        %733 = vmatpush2.msra.mxu0 0.0
        %734 = vmatprep.subr.mxu0 0.0
        %735 = vmatpush2.msra.mxu0 0.0
        %736 = vmatprep.subr.mxu0 0.0
        %737 = vmatpush2.msra.mxu0 0.0
        %738 = vmatprep.subr.mxu0 0.0
        %739 = vmatpush2.msra.mxu0 0.0
        %740 = vmatprep.subr.mxu0 0.0
        %741 = vmatpush2.msra.mxu0 0.0
        %742 = vmatprep.subr.mxu0 0.0
        %743 = vmatpush2.msra.mxu0 0.0
        %744 = vmatprep.subr.mxu0 0.0
        %745 = vmatpush2.msra.mxu0 0.0
        %746 = vmatprep.subr.mxu0 0.0
        %747 = vmatpush2.msra.mxu0 0.0
        %748 = vmatprep.subr.mxu0 0.0
        %749 = vmatpush2.msra.mxu0 0.0
        %750 = vmatprep.subr.mxu0 0.0
        %751 = vmatpush2.msra.mxu0 0.0
        %752 = vmatprep.subr.mxu0 0.0
        %753 = vmatpush2.msra.mxu0 0.0
        %754 = vmatprep.subr.mxu0 0.0
        %755 = vmatpush2.msra.mxu0 0.0
        %756 = vmatprep.mubr.f32.mxu0 0.0
        %757 = vmatmul.mubr.f32.gmra.mxu0 %v690
        %v758 = vpop.f32.mrf.mxu0
        %v759 = vadd.f32 0.0, %v758
        %v760 = vpop.f32.mrf.mxu0
        %v761 = vadd.f32 0.0, %v760
        %762 = vdwg.mxu0
        %s763 = scalar_lea.vmem %s7, 32
        %v764 = vld [vmem:[%s763] sm:$0xff]
        %766 = vset.pattern.permute.xlu0 0
        %767 = vperm.xlu0 %766, %v391
        %v768 = vpop.permute.xlu0 %767
        %vm770 = vcmask 15360
        %v772 = vsel %vm770, %v764, 0
        %vm774 = vcmask 1041408
        %v776 = vsel %vm774, %v685, 0
        %v779 = vsel %vm774, %v687, 0
        %781 = vmatprep.subr.mxu0 0.0
        %782 = vmatpush1.msra.mxu0 0.0
        %783 = vmatprep.subr.mxu0 0.0
        %784 = vmatpush1.msra.mxu0 0.0
        %785 = vmatprep.subr.mxu0 0.0
        %786 = vmatpush1.msra.mxu0 0.0
        %787 = vmatprep.subr.mxu0 0.0
        %788 = vmatpush1.msra.mxu0 0.0
        %789 = vmatprep.subr.mxu0 0.0
        %790 = vmatpush1.msra.mxu0 0.0
        %791 = vmatprep.subr.mxu0 0.0
        %792 = vmatpush1.msra.mxu0 0.0
        %793 = vmatprep.subr.mxu0 0.0
        %794 = vmatpush1.msra.mxu0 0.0
        %795 = vmatprep.subr.mxu0 0.0
        %796 = vmatpush1.msra.mxu0 0.0
        %797 = vmatprep.subr.mxu0 0.0
        %798 = vmatpush1.msra.mxu0 0.0
        %799 = vmatprep.subr.mxu0 0.0
        %800 = vmatpush1.msra.mxu0 0.0
        %801 = vmatprep.subr.mxu0 0.0
        %802 = vmatpush1.msra.mxu0 0.0
        %803 = vmatprep.subr.mxu0 0.0
        %804 = vmatpush1.msra.mxu0 0.0
        %805 = vmatprep.subr.mxu0 0.0
        %806 = vmatpush1.msra.mxu0 0.0
        %807 = vmatprep.subr.mxu0 0.0
        %808 = vmatpush1.msra.mxu0 0.0
        %809 = vmatprep.subr.mxu0 0.0
        %810 = vmatpush1.msra.mxu0 0.0
        %811 = vmatprep.subr.mxu0 %v779
        %812 = vmatpush1.msra.mxu0 %v776
        %813 = vmatprep.subr.mxu0 0.0
        %814 = vmatpush2.msra.mxu0 0.0
        %815 = vmatprep.subr.mxu0 0.0
        %816 = vmatpush2.msra.mxu0 0.0
        %817 = vmatprep.subr.mxu0 0.0
        %818 = vmatpush2.msra.mxu0 0.0
        %819 = vmatprep.subr.mxu0 0.0
        %820 = vmatpush2.msra.mxu0 0.0
        %821 = vmatprep.subr.mxu0 0.0
        %822 = vmatpush2.msra.mxu0 0.0
        %823 = vmatprep.subr.mxu0 0.0
        %824 = vmatpush2.msra.mxu0 0.0
        %825 = vmatprep.subr.mxu0 0.0
        %826 = vmatpush2.msra.mxu0 0.0
        %827 = vmatprep.subr.mxu0 0.0
        %828 = vmatpush2.msra.mxu0 0.0
        %829 = vmatprep.subr.mxu0 0.0
        %830 = vmatpush2.msra.mxu0 0.0
        %831 = vmatprep.subr.mxu0 0.0
        %832 = vmatpush2.msra.mxu0 0.0
        %833 = vmatprep.subr.mxu0 0.0
        %834 = vmatpush2.msra.mxu0 0.0
        %835 = vmatprep.subr.mxu0 0.0
        %836 = vmatpush2.msra.mxu0 0.0
        %837 = vmatprep.subr.mxu0 0.0
        %838 = vmatpush2.msra.mxu0 0.0
        %839 = vmatprep.subr.mxu0 0.0
        %840 = vmatpush2.msra.mxu0 0.0
        %841 = vmatprep.subr.mxu0 0.0
        %842 = vmatpush2.msra.mxu0 0.0
        %843 = vmatprep.subr.mxu0 0.0
        %844 = vmatpush2.msra.mxu0 0.0
        %845 = vmatprep.mubr.f32.mxu0 0.0
        %846 = vmatmul.mubr.f32.gmra.mxu0 %v772
        %v847 = vpop.f32.mrf.mxu0
        %v848 = vadd.f32 %v768, %v847
        %v849 = vpop.f32.mrf.mxu0
        %v850 = vadd.f32 %v768, %v849
        %851 = vdwg.mxu0
        %852 = vrot.lane.b32.xlu0 %v685, 17
        %v853 = vpop.permute.xlu0 %852
        %854 = vrot.lane.b32.xlu0 %v687, 17
        %v855 = vpop.permute.xlu0 %854
        %v856 = vlaneseq
        %v857 = vand.u32 %v856, 127
        %vm858 = vcmp.lt.s32.totalorder %v857, 17
        %v859 = vsel %vm858, %v853, %v855
        %v860 = vsel %vm858, %v855, %v853
        %v861 = vld [vmem:[%s8] sm:$0x3]
        %v863 = vlaneseq
        %v864 = vshrl.u32 %v863, 7
        %v865 = vsub.s32 0, %v864
        %v866 = vrot.slane %v861, %v865
        %v867 = vlaneseq
        %v868 = vshrl.u32 %v867, 7
        %v869 = vsub.s32 1, %v868
        %v870 = vrot.slane %v861, %v869
        %v873 = vmul.f32 %v860, %v866
        %v874 = vmul.f32 %v859, %v870
        %v875 = vld [vmem:[%s7] sm:$0xff]
        %v877 = vsel %vm770, %v875, 0
        %v880 = vsel %vm774, %v873, 0
        %v883 = vsel %vm774, %v874, 0
        %885 = vmatprep.subr.mxu0 0.0
        %886 = vmatpush1.msra.mxu0 0.0
        %887 = vmatprep.subr.mxu0 0.0
        %888 = vmatpush1.msra.mxu0 0.0
        %889 = vmatprep.subr.mxu0 0.0
        %890 = vmatpush1.msra.mxu0 0.0
        %891 = vmatprep.subr.mxu0 0.0
        %892 = vmatpush1.msra.mxu0 0.0
        %893 = vmatprep.subr.mxu0 0.0
        %894 = vmatpush1.msra.mxu0 0.0
        %895 = vmatprep.subr.mxu0 0.0
        %896 = vmatpush1.msra.mxu0 0.0
        %897 = vmatprep.subr.mxu0 0.0
        %898 = vmatpush1.msra.mxu0 0.0
        %899 = vmatprep.subr.mxu0 0.0
        %900 = vmatpush1.msra.mxu0 0.0
        %901 = vmatprep.subr.mxu0 0.0
        %902 = vmatpush1.msra.mxu0 0.0
        %903 = vmatprep.subr.mxu0 0.0
        %904 = vmatpush1.msra.mxu0 0.0
        %905 = vmatprep.subr.mxu0 0.0
        %906 = vmatpush1.msra.mxu0 0.0
        %907 = vmatprep.subr.mxu0 0.0
        %908 = vmatpush1.msra.mxu0 0.0
        %909 = vmatprep.subr.mxu0 0.0
        %910 = vmatpush1.msra.mxu0 0.0
        %911 = vmatprep.subr.mxu0 0.0
        %912 = vmatpush1.msra.mxu0 0.0
        %913 = vmatprep.subr.mxu0 0.0
        %914 = vmatpush1.msra.mxu0 0.0
        %915 = vmatprep.subr.mxu0 %v883
        %916 = vmatpush1.msra.mxu0 %v880
        %917 = vmatprep.subr.mxu0 0.0
        %918 = vmatpush2.msra.mxu0 0.0
        %919 = vmatprep.subr.mxu0 0.0
        %920 = vmatpush2.msra.mxu0 0.0
        %921 = vmatprep.subr.mxu0 0.0
        %922 = vmatpush2.msra.mxu0 0.0
        %923 = vmatprep.subr.mxu0 0.0
        %924 = vmatpush2.msra.mxu0 0.0
        %925 = vmatprep.subr.mxu0 0.0
        %926 = vmatpush2.msra.mxu0 0.0
        %927 = vmatprep.subr.mxu0 0.0
        %928 = vmatpush2.msra.mxu0 0.0
        %929 = vmatprep.subr.mxu0 0.0
        %930 = vmatpush2.msra.mxu0 0.0
        %931 = vmatprep.subr.mxu0 0.0
        %932 = vmatpush2.msra.mxu0 0.0
        %933 = vmatprep.subr.mxu0 0.0
        %934 = vmatpush2.msra.mxu0 0.0
        %935 = vmatprep.subr.mxu0 0.0
        %936 = vmatpush2.msra.mxu0 0.0
        %937 = vmatprep.subr.mxu0 0.0
        %938 = vmatpush2.msra.mxu0 0.0
        %939 = vmatprep.subr.mxu0 0.0
        %940 = vmatpush2.msra.mxu0 0.0
        %941 = vmatprep.subr.mxu0 0.0
        %942 = vmatpush2.msra.mxu0 0.0
        %943 = vmatprep.subr.mxu0 0.0
        %944 = vmatpush2.msra.mxu0 0.0
        %945 = vmatprep.subr.mxu0 0.0
        %946 = vmatpush2.msra.mxu0 0.0
        %947 = vmatprep.subr.mxu0 0.0
        %948 = vmatpush2.msra.mxu0 0.0
        %949 = vmatprep.mubr.f32.mxu0 0.0
        %950 = vmatmul.mubr.f32.gmra.mxu0 %v877
        %v951 = vpop.f32.mrf.mxu0
        %v952 = vadd.f32 0.0, %v951
        %v953 = vpop.f32.mrf.mxu0
        %v954 = vadd.f32 0.0, %v953
        %955 = vdwg.mxu0
        %v956 = vadd.f32 %v848, %v952
        %v957 = vadd.f32 %v850, %v954
        %958 = vrot.lane.b32.xlu0 %v685, 16
        %v959 = vpop.permute.xlu0 %958
        %960 = vrot.lane.b32.xlu0 %v687, 16
        %v961 = vpop.permute.xlu0 %960
        %vm962 = vcmp.lt.s32.totalorder %v857, 16
        %v963 = vsel %vm962, %v959, %v961
        %v964 = vsel %vm962, %v961, %v959
        %s965 = scalar_lea.vmem %s8, 2
        %v966 = vld [vmem:[%s965] sm:$0x3]
        %v968 = vlaneseq
        %v969 = vshrl.u32 %v968, 7
        %v970 = vsub.s32 0, %v969
        %v971 = vrot.slane %v966, %v970
        %v972 = vlaneseq
        %v973 = vshrl.u32 %v972, 7
        %v974 = vsub.s32 1, %v973
        %v975 = vrot.slane %v966, %v974
        %v978 = vmul.f32 %v964, %v971
        %v979 = vmul.f32 %v963, %v975
        %s980 = scalar_lea.vmem %s7, 8
        %v981 = vld [vmem:[%s980] sm:$0xff]
        %v983 = vsel %vm770, %v981, 0
        %v986 = vsel %vm774, %v978, 0
        %v989 = vsel %vm774, %v979, 0
        %991 = vmatprep.subr.mxu0 0.0
        %992 = vmatpush1.msra.mxu0 0.0
        %993 = vmatprep.subr.mxu0 0.0
        %994 = vmatpush1.msra.mxu0 0.0
        %995 = vmatprep.subr.mxu0 0.0
        %996 = vmatpush1.msra.mxu0 0.0
        %997 = vmatprep.subr.mxu0 0.0
        %998 = vmatpush1.msra.mxu0 0.0
        %999 = vmatprep.subr.mxu0 0.0
        %1000 = vmatpush1.msra.mxu0 0.0
        %1001 = vmatprep.subr.mxu0 0.0
        %1002 = vmatpush1.msra.mxu0 0.0
        %1003 = vmatprep.subr.mxu0 0.0
        %1004 = vmatpush1.msra.mxu0 0.0
        %1005 = vmatprep.subr.mxu0 0.0
        %1006 = vmatpush1.msra.mxu0 0.0
        %1007 = vmatprep.subr.mxu0 0.0
        %1008 = vmatpush1.msra.mxu0 0.0
        %1009 = vmatprep.subr.mxu0 0.0
        %1010 = vmatpush1.msra.mxu0 0.0
        %1011 = vmatprep.subr.mxu0 0.0
        %1012 = vmatpush1.msra.mxu0 0.0
        %1013 = vmatprep.subr.mxu0 0.0
        %1014 = vmatpush1.msra.mxu0 0.0
        %1015 = vmatprep.subr.mxu0 0.0
        %1016 = vmatpush1.msra.mxu0 0.0
        %1017 = vmatprep.subr.mxu0 0.0
        %1018 = vmatpush1.msra.mxu0 0.0
        %1019 = vmatprep.subr.mxu0 0.0
        %1020 = vmatpush1.msra.mxu0 0.0
        %1021 = vmatprep.subr.mxu0 %v989
        %1022 = vmatpush1.msra.mxu0 %v986
        %1023 = vmatprep.subr.mxu0 0.0
        %1024 = vmatpush2.msra.mxu0 0.0
        %1025 = vmatprep.subr.mxu0 0.0
        %1026 = vmatpush2.msra.mxu0 0.0
        %1027 = vmatprep.subr.mxu0 0.0
        %1028 = vmatpush2.msra.mxu0 0.0
        %1029 = vmatprep.subr.mxu0 0.0
        %1030 = vmatpush2.msra.mxu0 0.0
        %1031 = vmatprep.subr.mxu0 0.0
        %1032 = vmatpush2.msra.mxu0 0.0
        %1033 = vmatprep.subr.mxu0 0.0
        %1034 = vmatpush2.msra.mxu0 0.0
        %1035 = vmatprep.subr.mxu0 0.0
        %1036 = vmatpush2.msra.mxu0 0.0
        %1037 = vmatprep.subr.mxu0 0.0
        %1038 = vmatpush2.msra.mxu0 0.0
        %1039 = vmatprep.subr.mxu0 0.0
        %1040 = vmatpush2.msra.mxu0 0.0
        %1041 = vmatprep.subr.mxu0 0.0
        %1042 = vmatpush2.msra.mxu0 0.0
        %1043 = vmatprep.subr.mxu0 0.0
        %1044 = vmatpush2.msra.mxu0 0.0
        %1045 = vmatprep.subr.mxu0 0.0
        %1046 = vmatpush2.msra.mxu0 0.0
        %1047 = vmatprep.subr.mxu0 0.0
        %1048 = vmatpush2.msra.mxu0 0.0
        %1049 = vmatprep.subr.mxu0 0.0
        %1050 = vmatpush2.msra.mxu0 0.0
        %1051 = vmatprep.subr.mxu0 0.0
        %1052 = vmatpush2.msra.mxu0 0.0
        %1053 = vmatprep.subr.mxu0 0.0
        %1054 = vmatpush2.msra.mxu0 0.0
        %1055 = vmatprep.mubr.f32.mxu0 0.0
        %1056 = vmatmul.mubr.f32.gmra.mxu0 %v983
        %v1057 = vpop.f32.mrf.mxu0
        %v1058 = vadd.f32 0.0, %v1057
        %v1059 = vpop.f32.mrf.mxu0
        %v1060 = vadd.f32 0.0, %v1059
        %1061 = vdwg.mxu0
        %v1062 = vadd.f32 %v956, %v1058
        %v1063 = vadd.f32 %v957, %v1060
        %1064 = vrot.lane.b32.xlu0 %v685, 15
        %v1065 = vpop.permute.xlu0 %1064
        %1066 = vrot.lane.b32.xlu0 %v687, 15
        %v1067 = vpop.permute.xlu0 %1066
        %vm1068 = vcmp.lt.s32.totalorder %v857, 15
        %v1069 = vsel %vm1068, %v1065, %v1067
        %v1070 = vsel %vm1068, %v1067, %v1065
        %s1071 = scalar_lea.vmem %s8, 4
        %v1072 = vld [vmem:[%s1071] sm:$0x3]
        %v1074 = vlaneseq
        %v1075 = vshrl.u32 %v1074, 7
        %v1076 = vsub.s32 0, %v1075
        %v1077 = vrot.slane %v1072, %v1076
        %v1078 = vlaneseq
        %v1079 = vshrl.u32 %v1078, 7
        %v1080 = vsub.s32 1, %v1079
        %v1081 = vrot.slane %v1072, %v1080
        %v1084 = vmul.f32 %v1070, %v1077
        %v1085 = vmul.f32 %v1069, %v1081
        %s1086 = scalar_lea.vmem %s7, 16
        %v1087 = vld [vmem:[%s1086] sm:$0xff]
        %v1089 = vsel %vm770, %v1087, 0
        %v1092 = vsel %vm774, %v1084, 0
        %v1095 = vsel %vm774, %v1085, 0
        %1097 = vmatprep.subr.mxu0 0.0
        %1098 = vmatpush1.msra.mxu0 0.0
        %1099 = vmatprep.subr.mxu0 0.0
        %1100 = vmatpush1.msra.mxu0 0.0
        %1101 = vmatprep.subr.mxu0 0.0
        %1102 = vmatpush1.msra.mxu0 0.0
        %1103 = vmatprep.subr.mxu0 0.0
        %1104 = vmatpush1.msra.mxu0 0.0
        %1105 = vmatprep.subr.mxu0 0.0
        %1106 = vmatpush1.msra.mxu0 0.0
        %1107 = vmatprep.subr.mxu0 0.0
        %1108 = vmatpush1.msra.mxu0 0.0
        %1109 = vmatprep.subr.mxu0 0.0
        %1110 = vmatpush1.msra.mxu0 0.0
        %1111 = vmatprep.subr.mxu0 0.0
        %1112 = vmatpush1.msra.mxu0 0.0
        %1113 = vmatprep.subr.mxu0 0.0
        %1114 = vmatpush1.msra.mxu0 0.0
        %1115 = vmatprep.subr.mxu0 0.0
        %1116 = vmatpush1.msra.mxu0 0.0
        %1117 = vmatprep.subr.mxu0 0.0
        %1118 = vmatpush1.msra.mxu0 0.0
        %1119 = vmatprep.subr.mxu0 0.0
        %1120 = vmatpush1.msra.mxu0 0.0
        %1121 = vmatprep.subr.mxu0 0.0
        %1122 = vmatpush1.msra.mxu0 0.0
        %1123 = vmatprep.subr.mxu0 0.0
        %1124 = vmatpush1.msra.mxu0 0.0
        %1125 = vmatprep.subr.mxu0 0.0
        %1126 = vmatpush1.msra.mxu0 0.0
        %1127 = vmatprep.subr.mxu0 %v1095
        %1128 = vmatpush1.msra.mxu0 %v1092
        %1129 = vmatprep.subr.mxu0 0.0
        %1130 = vmatpush2.msra.mxu0 0.0
        %1131 = vmatprep.subr.mxu0 0.0
        %1132 = vmatpush2.msra.mxu0 0.0
        %1133 = vmatprep.subr.mxu0 0.0
        %1134 = vmatpush2.msra.mxu0 0.0
        %1135 = vmatprep.subr.mxu0 0.0
        %1136 = vmatpush2.msra.mxu0 0.0
        %1137 = vmatprep.subr.mxu0 0.0
        %1138 = vmatpush2.msra.mxu0 0.0
        %1139 = vmatprep.subr.mxu0 0.0
        %1140 = vmatpush2.msra.mxu0 0.0
        %1141 = vmatprep.subr.mxu0 0.0
        %1142 = vmatpush2.msra.mxu0 0.0
        %1143 = vmatprep.subr.mxu0 0.0
        %1144 = vmatpush2.msra.mxu0 0.0
        %1145 = vmatprep.subr.mxu0 0.0
        %1146 = vmatpush2.msra.mxu0 0.0
        %1147 = vmatprep.subr.mxu0 0.0
        %1148 = vmatpush2.msra.mxu0 0.0
        %1149 = vmatprep.subr.mxu0 0.0
        %1150 = vmatpush2.msra.mxu0 0.0
        %1151 = vmatprep.subr.mxu0 0.0
        %1152 = vmatpush2.msra.mxu0 0.0
        %1153 = vmatprep.subr.mxu0 0.0
        %1154 = vmatpush2.msra.mxu0 0.0
        %1155 = vmatprep.subr.mxu0 0.0
        %1156 = vmatpush2.msra.mxu0 0.0
        %1157 = vmatprep.subr.mxu0 0.0
        %1158 = vmatpush2.msra.mxu0 0.0
        %1159 = vmatprep.subr.mxu0 0.0
        %1160 = vmatpush2.msra.mxu0 0.0
        %1161 = vmatprep.mubr.f32.mxu0 0.0
        %1162 = vmatmul.mubr.f32.gmra.mxu0 %v1089
        %v1163 = vpop.f32.mrf.mxu0
        %v1164 = vadd.f32 0.0, %v1163
        %v1165 = vpop.f32.mrf.mxu0
        %v1166 = vadd.f32 0.0, %v1165
        %1167 = vdwg.mxu0
        %v1168 = vadd.f32 %v1062, %v1164
        %v1169 = vadd.f32 %v1063, %v1166
        %1170 = vrot.lane.b32.xlu0 %v685, 1
        %v1171 = vpop.permute.xlu0 %1170
        %1172 = vrot.lane.b32.xlu0 %v687, 1
        %v1173 = vpop.permute.xlu0 %1172
        %vm1174 = vcmp.lt.s32.totalorder %v857, 1
        %v1175 = vsel %vm1174, %v1171, %v1173
        %v1176 = vsel %vm1174, %v1173, %v1171
        %s1177 = scalar_lea.vmem %s8, 6
        %v1178 = vld [vmem:[%s1177] sm:$0x3]
        %v1180 = vlaneseq
        %v1181 = vshrl.u32 %v1180, 7
        %v1182 = vsub.s32 0, %v1181
        %v1183 = vrot.slane %v1178, %v1182
        %v1184 = vlaneseq
        %v1185 = vshrl.u32 %v1184, 7
        %v1186 = vsub.s32 1, %v1185
        %v1187 = vrot.slane %v1178, %v1186
        %v1190 = vmul.f32 %v1176, %v1183
        %v1191 = vmul.f32 %v1175, %v1187
        %s1192 = scalar_lea.vmem %s7, 24
        %v1193 = vld [vmem:[%s1192] sm:$0xff]
        %v1195 = vsel %vm770, %v1193, 0
        %v1198 = vsel %vm774, %v1190, 0
        %v1201 = vsel %vm774, %v1191, 0
        %1203 = vmatprep.subr.mxu0 0.0
        %1204 = vmatpush1.msra.mxu0 0.0
        %1205 = vmatprep.subr.mxu0 0.0
        %1206 = vmatpush1.msra.mxu0 0.0
        %1207 = vmatprep.subr.mxu0 0.0
        %1208 = vmatpush1.msra.mxu0 0.0
        %1209 = vmatprep.subr.mxu0 0.0
        %1210 = vmatpush1.msra.mxu0 0.0
        %1211 = vmatprep.subr.mxu0 0.0
        %1212 = vmatpush1.msra.mxu0 0.0
        %1213 = vmatprep.subr.mxu0 0.0
        %1214 = vmatpush1.msra.mxu0 0.0
        %1215 = vmatprep.subr.mxu0 0.0
        %1216 = vmatpush1.msra.mxu0 0.0
        %1217 = vmatprep.subr.mxu0 0.0
        %1218 = vmatpush1.msra.mxu0 0.0
        %1219 = vmatprep.subr.mxu0 0.0
        %1220 = vmatpush1.msra.mxu0 0.0
        %1221 = vmatprep.subr.mxu0 0.0
        %1222 = vmatpush1.msra.mxu0 0.0
        %1223 = vmatprep.subr.mxu0 0.0
        %1224 = vmatpush1.msra.mxu0 0.0
        %1225 = vmatprep.subr.mxu0 0.0
        %1226 = vmatpush1.msra.mxu0 0.0
        %1227 = vmatprep.subr.mxu0 0.0
        %1228 = vmatpush1.msra.mxu0 0.0
        %1229 = vmatprep.subr.mxu0 0.0
        %1230 = vmatpush1.msra.mxu0 0.0
        %1231 = vmatprep.subr.mxu0 0.0
        %1232 = vmatpush1.msra.mxu0 0.0
        %1233 = vmatprep.subr.mxu0 %v1201
        %1234 = vmatpush1.msra.mxu0 %v1198
        %1235 = vmatprep.subr.mxu0 0.0
        %1236 = vmatpush2.msra.mxu0 0.0
        %1237 = vmatprep.subr.mxu0 0.0
        %1238 = vmatpush2.msra.mxu0 0.0
        %1239 = vmatprep.subr.mxu0 0.0
        %1240 = vmatpush2.msra.mxu0 0.0
        %1241 = vmatprep.subr.mxu0 0.0
        %1242 = vmatpush2.msra.mxu0 0.0
        %1243 = vmatprep.subr.mxu0 0.0
        %1244 = vmatpush2.msra.mxu0 0.0
        %1245 = vmatprep.subr.mxu0 0.0
        %1246 = vmatpush2.msra.mxu0 0.0
        %1247 = vmatprep.subr.mxu0 0.0
        %1248 = vmatpush2.msra.mxu0 0.0
        %1249 = vmatprep.subr.mxu0 0.0
        %1250 = vmatpush2.msra.mxu0 0.0
        %1251 = vmatprep.subr.mxu0 0.0
        %1252 = vmatpush2.msra.mxu0 0.0
        %1253 = vmatprep.subr.mxu0 0.0
        %1254 = vmatpush2.msra.mxu0 0.0
        %1255 = vmatprep.subr.mxu0 0.0
        %1256 = vmatpush2.msra.mxu0 0.0
        %1257 = vmatprep.subr.mxu0 0.0
        %1258 = vmatpush2.msra.mxu0 0.0
        %1259 = vmatprep.subr.mxu0 0.0
        %1260 = vmatpush2.msra.mxu0 0.0
        %1261 = vmatprep.subr.mxu0 0.0
        %1262 = vmatpush2.msra.mxu0 0.0
        %1263 = vmatprep.subr.mxu0 0.0
        %1264 = vmatpush2.msra.mxu0 0.0
        %1265 = vmatprep.subr.mxu0 0.0
        %1266 = vmatpush2.msra.mxu0 0.0
        %1267 = vmatprep.mubr.f32.mxu0 0.0
        %1268 = vmatmul.mubr.f32.gmra.mxu0 %v1195
        %v1269 = vpop.f32.mrf.mxu0
        %v1270 = vadd.f32 0.0, %v1269
        %v1271 = vpop.f32.mrf.mxu0
        %v1272 = vadd.f32 0.0, %v1271
        %1273 = vdwg.mxu0
        %v1274 = vadd.f32 %v1168, %v1270
        %v1275 = vadd.f32 %v1169, %v1272
        %1276 = vrot.lane.b32.xlu0 %v685, 127
        %v1277 = vpop.permute.xlu0 %1276
        %1278 = vrot.lane.b32.xlu0 %v687, 127
        %v1279 = vpop.permute.xlu0 %1278
        %vm1280 = vcmp.lt.s32.totalorder %v857, 127
        %v1281 = vsel %vm1280, %v1277, %v1279
        %v1282 = vsel %vm1280, %v1279, %v1277
        %s1283 = scalar_lea.vmem %s8, 10
        %v1284 = vld [vmem:[%s1283] sm:$0x3]
        %v1286 = vlaneseq
        %v1287 = vshrl.u32 %v1286, 7
        %v1288 = vsub.s32 0, %v1287
        %v1289 = vrot.slane %v1284, %v1288
        %v1290 = vlaneseq
        %v1291 = vshrl.u32 %v1290, 7
        %v1292 = vsub.s32 1, %v1291
        %v1293 = vrot.slane %v1284, %v1292
        %v1296 = vmul.f32 %v1281, %v1289
        %v1297 = vmul.f32 %v1282, %v1293
        %s1298 = scalar_lea.vmem %s7, 40
        %v1299 = vld [vmem:[%s1298] sm:$0xff]
        %v1301 = vsel %vm770, %v1299, 0
        %v1304 = vsel %vm774, %v1296, 0
        %v1307 = vsel %vm774, %v1297, 0
        %1309 = vmatprep.subr.mxu0 0.0
        %1310 = vmatpush1.msra.mxu0 0.0
        %1311 = vmatprep.subr.mxu0 0.0
        %1312 = vmatpush1.msra.mxu0 0.0
        %1313 = vmatprep.subr.mxu0 0.0
        %1314 = vmatpush1.msra.mxu0 0.0
        %1315 = vmatprep.subr.mxu0 0.0
        %1316 = vmatpush1.msra.mxu0 0.0
        %1317 = vmatprep.subr.mxu0 0.0
        %1318 = vmatpush1.msra.mxu0 0.0
        %1319 = vmatprep.subr.mxu0 0.0
        %1320 = vmatpush1.msra.mxu0 0.0
        %1321 = vmatprep.subr.mxu0 0.0
        %1322 = vmatpush1.msra.mxu0 0.0
        %1323 = vmatprep.subr.mxu0 0.0
        %1324 = vmatpush1.msra.mxu0 0.0
        %1325 = vmatprep.subr.mxu0 0.0
        %1326 = vmatpush1.msra.mxu0 0.0
        %1327 = vmatprep.subr.mxu0 0.0
        %1328 = vmatpush1.msra.mxu0 0.0
        %1329 = vmatprep.subr.mxu0 0.0
        %1330 = vmatpush1.msra.mxu0 0.0
        %1331 = vmatprep.subr.mxu0 0.0
        %1332 = vmatpush1.msra.mxu0 0.0
        %1333 = vmatprep.subr.mxu0 0.0
        %1334 = vmatpush1.msra.mxu0 0.0
        %1335 = vmatprep.subr.mxu0 0.0
        %1336 = vmatpush1.msra.mxu0 0.0
        %1337 = vmatprep.subr.mxu0 0.0
        %1338 = vmatpush1.msra.mxu0 0.0
        %1339 = vmatprep.subr.mxu0 %v1307
        %1340 = vmatpush1.msra.mxu0 %v1304
        %1341 = vmatprep.subr.mxu0 0.0
        %1342 = vmatpush2.msra.mxu0 0.0
        %1343 = vmatprep.subr.mxu0 0.0
        %1344 = vmatpush2.msra.mxu0 0.0
        %1345 = vmatprep.subr.mxu0 0.0
        %1346 = vmatpush2.msra.mxu0 0.0
        %1347 = vmatprep.subr.mxu0 0.0
        %1348 = vmatpush2.msra.mxu0 0.0
        %1349 = vmatprep.subr.mxu0 0.0
        %1350 = vmatpush2.msra.mxu0 0.0
        %1351 = vmatprep.subr.mxu0 0.0
        %1352 = vmatpush2.msra.mxu0 0.0
        %1353 = vmatprep.subr.mxu0 0.0
        %1354 = vmatpush2.msra.mxu0 0.0
        %1355 = vmatprep.subr.mxu0 0.0
        %1356 = vmatpush2.msra.mxu0 0.0
        %1357 = vmatprep.subr.mxu0 0.0
        %1358 = vmatpush2.msra.mxu0 0.0
        %1359 = vmatprep.subr.mxu0 0.0
        %1360 = vmatpush2.msra.mxu0 0.0
        %1361 = vmatprep.subr.mxu0 0.0
        %1362 = vmatpush2.msra.mxu0 0.0
        %1363 = vmatprep.subr.mxu0 0.0
        %1364 = vmatpush2.msra.mxu0 0.0
        %1365 = vmatprep.subr.mxu0 0.0
        %1366 = vmatpush2.msra.mxu0 0.0
        %1367 = vmatprep.subr.mxu0 0.0
        %1368 = vmatpush2.msra.mxu0 0.0
        %1369 = vmatprep.subr.mxu0 0.0
        %1370 = vmatpush2.msra.mxu0 0.0
        %1371 = vmatprep.subr.mxu0 0.0
        %1372 = vmatpush2.msra.mxu0 0.0
        %1373 = vmatprep.mubr.f32.mxu0 0.0
        %1374 = vmatmul.mubr.f32.gmra.mxu0 %v1301
        %v1375 = vpop.f32.mrf.mxu0
        %v1376 = vadd.f32 0.0, %v1375
        %v1377 = vpop.f32.mrf.mxu0
        %v1378 = vadd.f32 0.0, %v1377
        %1379 = vdwg.mxu0
        %v1380 = vadd.f32 %v1274, %v1376
        %v1381 = vadd.f32 %v1275, %v1378
        %1382 = vrot.lane.b32.xlu0 %v685, 113
        %v1383 = vpop.permute.xlu0 %1382
        %1384 = vrot.lane.b32.xlu0 %v687, 113
        %v1385 = vpop.permute.xlu0 %1384
        %vm1386 = vcmp.lt.s32.totalorder %v857, 113
        %v1387 = vsel %vm1386, %v1383, %v1385
        %v1388 = vsel %vm1386, %v1385, %v1383
        %s1389 = scalar_lea.vmem %s8, 12
        %v1390 = vld [vmem:[%s1389] sm:$0x3]
        %v1392 = vlaneseq
        %v1393 = vshrl.u32 %v1392, 7
        %v1394 = vsub.s32 0, %v1393
        %v1395 = vrot.slane %v1390, %v1394
        %v1396 = vlaneseq
        %v1397 = vshrl.u32 %v1396, 7
        %v1398 = vsub.s32 1, %v1397
        %v1399 = vrot.slane %v1390, %v1398
        %v1402 = vmul.f32 %v1387, %v1395
        %v1403 = vmul.f32 %v1388, %v1399
        %s1404 = scalar_lea.vmem %s7, 48
        %v1405 = vld [vmem:[%s1404] sm:$0xff]
        %v1407 = vsel %vm770, %v1405, 0
        %v1410 = vsel %vm774, %v1402, 0
        %v1413 = vsel %vm774, %v1403, 0
        %1415 = vmatprep.subr.mxu0 0.0
        %1416 = vmatpush1.msra.mxu0 0.0
        %1417 = vmatprep.subr.mxu0 0.0
        %1418 = vmatpush1.msra.mxu0 0.0
        %1419 = vmatprep.subr.mxu0 0.0
        %1420 = vmatpush1.msra.mxu0 0.0
        %1421 = vmatprep.subr.mxu0 0.0
        %1422 = vmatpush1.msra.mxu0 0.0
        %1423 = vmatprep.subr.mxu0 0.0
        %1424 = vmatpush1.msra.mxu0 0.0
        %1425 = vmatprep.subr.mxu0 0.0
        %1426 = vmatpush1.msra.mxu0 0.0
        %1427 = vmatprep.subr.mxu0 0.0
        %1428 = vmatpush1.msra.mxu0 0.0
        %1429 = vmatprep.subr.mxu0 0.0
        %1430 = vmatpush1.msra.mxu0 0.0
        %1431 = vmatprep.subr.mxu0 0.0
        %1432 = vmatpush1.msra.mxu0 0.0
        %1433 = vmatprep.subr.mxu0 0.0
        %1434 = vmatpush1.msra.mxu0 0.0
        %1435 = vmatprep.subr.mxu0 0.0
        %1436 = vmatpush1.msra.mxu0 0.0
        %1437 = vmatprep.subr.mxu0 0.0
        %1438 = vmatpush1.msra.mxu0 0.0
        %1439 = vmatprep.subr.mxu0 0.0
        %1440 = vmatpush1.msra.mxu0 0.0
        %1441 = vmatprep.subr.mxu0 0.0
        %1442 = vmatpush1.msra.mxu0 0.0
        %1443 = vmatprep.subr.mxu0 0.0
        %1444 = vmatpush1.msra.mxu0 0.0
        %1445 = vmatprep.subr.mxu0 %v1413
        %1446 = vmatpush1.msra.mxu0 %v1410
        %1447 = vmatprep.subr.mxu0 0.0
        %1448 = vmatpush2.msra.mxu0 0.0
        %1449 = vmatprep.subr.mxu0 0.0
        %1450 = vmatpush2.msra.mxu0 0.0
        %1451 = vmatprep.subr.mxu0 0.0
        %1452 = vmatpush2.msra.mxu0 0.0
        %1453 = vmatprep.subr.mxu0 0.0
        %1454 = vmatpush2.msra.mxu0 0.0
        %1455 = vmatprep.subr.mxu0 0.0
        %1456 = vmatpush2.msra.mxu0 0.0
        %1457 = vmatprep.subr.mxu0 0.0
        %1458 = vmatpush2.msra.mxu0 0.0
        %1459 = vmatprep.subr.mxu0 0.0
        %1460 = vmatpush2.msra.mxu0 0.0
        %1461 = vmatprep.subr.mxu0 0.0
        %1462 = vmatpush2.msra.mxu0 0.0
        %1463 = vmatprep.subr.mxu0 0.0
        %1464 = vmatpush2.msra.mxu0 0.0
        %1465 = vmatprep.subr.mxu0 0.0
        %1466 = vmatpush2.msra.mxu0 0.0
        %1467 = vmatprep.subr.mxu0 0.0
        %1468 = vmatpush2.msra.mxu0 0.0
        %1469 = vmatprep.subr.mxu0 0.0
        %1470 = vmatpush2.msra.mxu0 0.0
        %1471 = vmatprep.subr.mxu0 0.0
        %1472 = vmatpush2.msra.mxu0 0.0
        %1473 = vmatprep.subr.mxu0 0.0
        %1474 = vmatpush2.msra.mxu0 0.0
        %1475 = vmatprep.subr.mxu0 0.0
        %1476 = vmatpush2.msra.mxu0 0.0
        %1477 = vmatprep.subr.mxu0 0.0
        %1478 = vmatpush2.msra.mxu0 0.0
        %1479 = vmatprep.mubr.f32.mxu0 0.0
        %1480 = vmatmul.mubr.f32.gmra.mxu0 %v1407
        %v1481 = vpop.f32.mrf.mxu0
        %v1482 = vadd.f32 0.0, %v1481
        %v1483 = vpop.f32.mrf.mxu0
        %v1484 = vadd.f32 0.0, %v1483
        %1485 = vdwg.mxu0
        %v1486 = vadd.f32 %v1380, %v1482
        %v1487 = vadd.f32 %v1381, %v1484
        %1488 = vrot.lane.b32.xlu0 %v685, 112
        %v1489 = vpop.permute.xlu0 %1488
        %1490 = vrot.lane.b32.xlu0 %v687, 112
        %v1491 = vpop.permute.xlu0 %1490
        %vm1492 = vcmp.lt.s32.totalorder %v857, 112
        %v1493 = vsel %vm1492, %v1489, %v1491
        %v1494 = vsel %vm1492, %v1491, %v1489
        %s1495 = scalar_lea.vmem %s8, 14
        %v1496 = vld [vmem:[%s1495] sm:$0x3]
        %v1498 = vlaneseq
        %v1499 = vshrl.u32 %v1498, 7
        %v1500 = vsub.s32 0, %v1499
        %v1501 = vrot.slane %v1496, %v1500
        %v1502 = vlaneseq
        %v1503 = vshrl.u32 %v1502, 7
        %v1504 = vsub.s32 1, %v1503
        %v1505 = vrot.slane %v1496, %v1504
        %v1508 = vmul.f32 %v1493, %v1501
        %v1509 = vmul.f32 %v1494, %v1505
        %s1510 = scalar_lea.vmem %s7, 56
        %v1511 = vld [vmem:[%s1510] sm:$0xff]
        %v1513 = vsel %vm770, %v1511, 0
        %v1516 = vsel %vm774, %v1508, 0
        %v1519 = vsel %vm774, %v1509, 0
        %1521 = vmatprep.subr.mxu0 0.0
        %1522 = vmatpush1.msra.mxu0 0.0
        %1523 = vmatprep.subr.mxu0 0.0
        %1524 = vmatpush1.msra.mxu0 0.0
        %1525 = vmatprep.subr.mxu0 0.0
        %1526 = vmatpush1.msra.mxu0 0.0
        %1527 = vmatprep.subr.mxu0 0.0
        %1528 = vmatpush1.msra.mxu0 0.0
        %1529 = vmatprep.subr.mxu0 0.0
        %1530 = vmatpush1.msra.mxu0 0.0
        %1531 = vmatprep.subr.mxu0 0.0
        %1532 = vmatpush1.msra.mxu0 0.0
        %1533 = vmatprep.subr.mxu0 0.0
        %1534 = vmatpush1.msra.mxu0 0.0
        %1535 = vmatprep.subr.mxu0 0.0
        %1536 = vmatpush1.msra.mxu0 0.0
        %1537 = vmatprep.subr.mxu0 0.0
        %1538 = vmatpush1.msra.mxu0 0.0
        %1539 = vmatprep.subr.mxu0 0.0
        %1540 = vmatpush1.msra.mxu0 0.0
        %1541 = vmatprep.subr.mxu0 0.0
        %1542 = vmatpush1.msra.mxu0 0.0
        %1543 = vmatprep.subr.mxu0 0.0
        %1544 = vmatpush1.msra.mxu0 0.0
        %1545 = vmatprep.subr.mxu0 0.0
        %1546 = vmatpush1.msra.mxu0 0.0
        %1547 = vmatprep.subr.mxu0 0.0
        %1548 = vmatpush1.msra.mxu0 0.0
        %1549 = vmatprep.subr.mxu0 0.0
        %1550 = vmatpush1.msra.mxu0 0.0
        %1551 = vmatprep.subr.mxu0 %v1519
        %1552 = vmatpush1.msra.mxu0 %v1516
        %1553 = vmatprep.subr.mxu0 0.0
        %1554 = vmatpush2.msra.mxu0 0.0
        %1555 = vmatprep.subr.mxu0 0.0
        %1556 = vmatpush2.msra.mxu0 0.0
        %1557 = vmatprep.subr.mxu0 0.0
        %1558 = vmatpush2.msra.mxu0 0.0
        %1559 = vmatprep.subr.mxu0 0.0
        %1560 = vmatpush2.msra.mxu0 0.0
        %1561 = vmatprep.subr.mxu0 0.0
        %1562 = vmatpush2.msra.mxu0 0.0
        %1563 = vmatprep.subr.mxu0 0.0
        %1564 = vmatpush2.msra.mxu0 0.0
        %1565 = vmatprep.subr.mxu0 0.0
        %1566 = vmatpush2.msra.mxu0 0.0
        %1567 = vmatprep.subr.mxu0 0.0
        %1568 = vmatpush2.msra.mxu0 0.0
        %1569 = vmatprep.subr.mxu0 0.0
        %1570 = vmatpush2.msra.mxu0 0.0
        %1571 = vmatprep.subr.mxu0 0.0
        %1572 = vmatpush2.msra.mxu0 0.0
        %1573 = vmatprep.subr.mxu0 0.0
        %1574 = vmatpush2.msra.mxu0 0.0
        %1575 = vmatprep.subr.mxu0 0.0
        %1576 = vmatpush2.msra.mxu0 0.0
        %1577 = vmatprep.subr.mxu0 0.0
        %1578 = vmatpush2.msra.mxu0 0.0
        %1579 = vmatprep.subr.mxu0 0.0
        %1580 = vmatpush2.msra.mxu0 0.0
        %1581 = vmatprep.subr.mxu0 0.0
        %1582 = vmatpush2.msra.mxu0 0.0
        %1583 = vmatprep.subr.mxu0 0.0
        %1584 = vmatpush2.msra.mxu0 0.0
        %1585 = vmatprep.mubr.f32.mxu0 0.0
        %1586 = vmatmul.mubr.f32.gmra.mxu0 %v1513
        %v1587 = vpop.f32.mrf.mxu0
        %v1588 = vadd.f32 0.0, %v1587
        %v1589 = vpop.f32.mrf.mxu0
        %v1590 = vadd.f32 0.0, %v1589
        %1591 = vdwg.mxu0
        %v1592 = vadd.f32 %v1486, %v1588
        %v1593 = vadd.f32 %v1487, %v1590
        %1594 = vrot.lane.b32.xlu0 %v685, 111
        %v1595 = vpop.permute.xlu0 %1594
        %1596 = vrot.lane.b32.xlu0 %v687, 111
        %v1597 = vpop.permute.xlu0 %1596
        %vm1598 = vcmp.lt.s32.totalorder %v857, 111
        %v1599 = vsel %vm1598, %v1595, %v1597
        %v1600 = vsel %vm1598, %v1597, %v1595
        %s1601 = scalar_lea.vmem %s8, 16
        %v1602 = vld [vmem:[%s1601] sm:$0x3]
        %v1604 = vlaneseq
        %v1605 = vshrl.u32 %v1604, 7
        %v1606 = vsub.s32 0, %v1605
        %v1607 = vrot.slane %v1602, %v1606
        %v1608 = vlaneseq
        %v1609 = vshrl.u32 %v1608, 7
        %v1610 = vsub.s32 1, %v1609
        %v1611 = vrot.slane %v1602, %v1610
        %v1614 = vmul.f32 %v1599, %v1607
        %v1615 = vmul.f32 %v1600, %v1611
        %s1616 = scalar_lea.vmem %s7, 64
        %v1617 = vld [vmem:[%s1616] sm:$0xff]
        %v1619 = vsel %vm770, %v1617, 0
        %v1622 = vsel %vm774, %v1614, 0
        %v1625 = vsel %vm774, %v1615, 0
        %1627 = vmatprep.subr.mxu0 0.0
        %1628 = vmatpush1.msra.mxu0 0.0
        %1629 = vmatprep.subr.mxu0 0.0
        %1630 = vmatpush1.msra.mxu0 0.0
        %1631 = vmatprep.subr.mxu0 0.0
        %1632 = vmatpush1.msra.mxu0 0.0
        %1633 = vmatprep.subr.mxu0 0.0
        %1634 = vmatpush1.msra.mxu0 0.0
        %1635 = vmatprep.subr.mxu0 0.0
        %1636 = vmatpush1.msra.mxu0 0.0
        %1637 = vmatprep.subr.mxu0 0.0
        %1638 = vmatpush1.msra.mxu0 0.0
        %1639 = vmatprep.subr.mxu0 0.0
        %1640 = vmatpush1.msra.mxu0 0.0
        %1641 = vmatprep.subr.mxu0 0.0
        %1642 = vmatpush1.msra.mxu0 0.0
        %1643 = vmatprep.subr.mxu0 0.0
        %1644 = vmatpush1.msra.mxu0 0.0
        %1645 = vmatprep.subr.mxu0 0.0
        %1646 = vmatpush1.msra.mxu0 0.0
        %1647 = vmatprep.subr.mxu0 0.0
        %1648 = vmatpush1.msra.mxu0 0.0
        %1649 = vmatprep.subr.mxu0 0.0
        %1650 = vmatpush1.msra.mxu0 0.0
        %1651 = vmatprep.subr.mxu0 0.0
        %1652 = vmatpush1.msra.mxu0 0.0
        %1653 = vmatprep.subr.mxu0 0.0
        %1654 = vmatpush1.msra.mxu0 0.0
        %1655 = vmatprep.subr.mxu0 0.0
        %1656 = vmatpush1.msra.mxu0 0.0
        %1657 = vmatprep.subr.mxu0 %v1625
        %1658 = vmatpush1.msra.mxu0 %v1622
        %1659 = vmatprep.subr.mxu0 0.0
        %1660 = vmatpush2.msra.mxu0 0.0
        %1661 = vmatprep.subr.mxu0 0.0
        %1662 = vmatpush2.msra.mxu0 0.0
        %1663 = vmatprep.subr.mxu0 0.0
        %1664 = vmatpush2.msra.mxu0 0.0
        %1665 = vmatprep.subr.mxu0 0.0
        %1666 = vmatpush2.msra.mxu0 0.0
        %1667 = vmatprep.subr.mxu0 0.0
        %1668 = vmatpush2.msra.mxu0 0.0
        %1669 = vmatprep.subr.mxu0 0.0
        %1670 = vmatpush2.msra.mxu0 0.0
        %1671 = vmatprep.subr.mxu0 0.0
        %1672 = vmatpush2.msra.mxu0 0.0
        %1673 = vmatprep.subr.mxu0 0.0
        %1674 = vmatpush2.msra.mxu0 0.0
        %1675 = vmatprep.subr.mxu0 0.0
        %1676 = vmatpush2.msra.mxu0 0.0
        %1677 = vmatprep.subr.mxu0 0.0
        %1678 = vmatpush2.msra.mxu0 0.0
        %1679 = vmatprep.subr.mxu0 0.0
        %1680 = vmatpush2.msra.mxu0 0.0
        %1681 = vmatprep.subr.mxu0 0.0
        %1682 = vmatpush2.msra.mxu0 0.0
        %1683 = vmatprep.subr.mxu0 0.0
        %1684 = vmatpush2.msra.mxu0 0.0
        %1685 = vmatprep.subr.mxu0 0.0
        %1686 = vmatpush2.msra.mxu0 0.0
        %1687 = vmatprep.subr.mxu0 0.0
        %1688 = vmatpush2.msra.mxu0 0.0
        %1689 = vmatprep.subr.mxu0 0.0
        %1690 = vmatpush2.msra.mxu0 0.0
        %1691 = vmatprep.mubr.f32.mxu0 0.0
        %1692 = vmatmul.mubr.f32.gmra.mxu0 %v1619
        %v1693 = vpop.f32.mrf.mxu0
        %v1694 = vadd.f32 0.0, %v1693
        %v1695 = vpop.f32.mrf.mxu0
        %v1696 = vadd.f32 0.0, %v1695
        %1697 = vdwg.mxu0
        %v1698 = vadd.f32 %v1592, %v1694
        %v1699 = vadd.f32 %v1593, %v1696
        %v1701 = vsel %vm770, %v392, 0
        %v1704 = vsel %vm774, %v759, 0
        %v1707 = vsel %vm774, %v761, 0
        %1709 = vmatprep.subr.mxu0 0.0
        %1710 = vmatpush1.msra.mxu0 0.0
        %1711 = vmatprep.subr.mxu0 0.0
        %1712 = vmatpush1.msra.mxu0 0.0
        %1713 = vmatprep.subr.mxu0 0.0
        %1714 = vmatpush1.msra.mxu0 0.0
        %1715 = vmatprep.subr.mxu0 0.0
        %1716 = vmatpush1.msra.mxu0 0.0
        %1717 = vmatprep.subr.mxu0 0.0
        %1718 = vmatpush1.msra.mxu0 0.0
        %1719 = vmatprep.subr.mxu0 0.0
        %1720 = vmatpush1.msra.mxu0 0.0
        %1721 = vmatprep.subr.mxu0 0.0
        %1722 = vmatpush1.msra.mxu0 0.0
        %1723 = vmatprep.subr.mxu0 0.0
        %1724 = vmatpush1.msra.mxu0 0.0
        %1725 = vmatprep.subr.mxu0 0.0
        %1726 = vmatpush1.msra.mxu0 0.0
        %1727 = vmatprep.subr.mxu0 0.0
        %1728 = vmatpush1.msra.mxu0 0.0
        %1729 = vmatprep.subr.mxu0 0.0
        %1730 = vmatpush1.msra.mxu0 0.0
        %1731 = vmatprep.subr.mxu0 0.0
        %1732 = vmatpush1.msra.mxu0 0.0
        %1733 = vmatprep.subr.mxu0 0.0
        %1734 = vmatpush1.msra.mxu0 0.0
        %1735 = vmatprep.subr.mxu0 0.0
        %1736 = vmatpush1.msra.mxu0 0.0
        %1737 = vmatprep.subr.mxu0 0.0
        %1738 = vmatpush1.msra.mxu0 0.0
        %1739 = vmatprep.subr.mxu0 %v1707
        %1740 = vmatpush1.msra.mxu0 %v1704
        %1741 = vmatprep.subr.mxu0 0.0
        %1742 = vmatpush2.msra.mxu0 0.0
        %1743 = vmatprep.subr.mxu0 0.0
        %1744 = vmatpush2.msra.mxu0 0.0
        %1745 = vmatprep.subr.mxu0 0.0
        %1746 = vmatpush2.msra.mxu0 0.0
        %1747 = vmatprep.subr.mxu0 0.0
        %1748 = vmatpush2.msra.mxu0 0.0
        %1749 = vmatprep.subr.mxu0 0.0
        %1750 = vmatpush2.msra.mxu0 0.0
        %1751 = vmatprep.subr.mxu0 0.0
        %1752 = vmatpush2.msra.mxu0 0.0
        %1753 = vmatprep.subr.mxu0 0.0
        %1754 = vmatpush2.msra.mxu0 0.0
        %1755 = vmatprep.subr.mxu0 0.0
        %1756 = vmatpush2.msra.mxu0 0.0
        %1757 = vmatprep.subr.mxu0 0.0
        %1758 = vmatpush2.msra.mxu0 0.0
        %1759 = vmatprep.subr.mxu0 0.0
        %1760 = vmatpush2.msra.mxu0 0.0
        %1761 = vmatprep.subr.mxu0 0.0
        %1762 = vmatpush2.msra.mxu0 0.0
        %1763 = vmatprep.subr.mxu0 0.0
        %1764 = vmatpush2.msra.mxu0 0.0
        %1765 = vmatprep.subr.mxu0 0.0
        %1766 = vmatpush2.msra.mxu0 0.0
        %1767 = vmatprep.subr.mxu0 0.0
        %1768 = vmatpush2.msra.mxu0 0.0
        %1769 = vmatprep.subr.mxu0 0.0
        %1770 = vmatpush2.msra.mxu0 0.0
        %1771 = vmatprep.subr.mxu0 0.0
        %1772 = vmatpush2.msra.mxu0 0.0
        %1773 = vmatprep.mubr.f32.mxu0 0.0
        %1774 = vmatmul.mubr.f32.gmra.mxu0 %v1701
        %v1775 = vpop.f32.mrf.mxu0
        %v1776 = vadd.f32 0.0, %v1775
        %v1777 = vpop.f32.mrf.mxu0
        %v1778 = vadd.f32 0.0, %v1777
        %1779 = vdwg.mxu0
        %v1780 = vadd.f32 %v1698, %v1699
        %1781 = vadd.xlane.f32.xlu0 %v1780
        %v1782 = vpop.xlane.xlu0 %1781
        %v1783 = vmul.f32 %v1782, 0.00390625
        %v1784 = vadd.f32 %v1776, %v1778
        %1785 = vadd.xlane.f32.xlu0 %v1784
        %v1786 = vpop.xlane.xlu0 %1785
        %v1787 = vmul.f32 %v1786, 0.00390625
        %v1788 = vrot.slane %v1783, 4
        %v1789 = vmax.f32 %v1783, %v1788
        %v1790 = vrot.slane %v1789, 2
        %v1791 = vmax.f32 %v1789, %v1790
        %v1792 = vrot.slane %v1791, 1
        %v1793 = vmax.f32 %v1791, %v1792
        %v1794 = vrot.slane %v1787, 4
        %v1795 = vmax.f32 %v1787, %v1794
        %v1796 = vrot.slane %v1795, 2
        %v1797 = vmax.f32 %v1795, %v1796
        %v1798 = vrot.slane %v1797, 1
        %v1799 = vmax.f32 %v1797, %v1798
        %v1800 = vmax.f32 %v1793, %v1799
        %v1801 = vsub.f32 %v1783, %v1800
        %v1802 = vmul.f32 %v1801, 1.442695
        %v1803 = vpow.pop %v1802
        %v1804 = vsub.f32 %v1787, %v1800
        %v1805 = vmul.f32 %v1804, 1.442695
        %v1806 = vpow.pop %v1805
        %v1807 = vrot.slane %v1803, 4
        %v1808 = vadd.f32 %v1803, %v1807
        %v1809 = vrot.slane %v1808, 2
        %v1810 = vadd.f32 %v1808, %v1809
        %v1811 = vrot.slane %v1810, 1
        %v1812 = vadd.f32 %v1810, %v1811
        %v1813 = vrot.slane %v1806, 4
        %v1814 = vadd.f32 %v1806, %v1813
        %v1815 = vrot.slane %v1814, 2
        %v1816 = vadd.f32 %v1814, %v1815
        %v1817 = vrot.slane %v1816, 1
        %v1818 = vadd.f32 %v1816, %v1817
        %v1819 = vadd.f32 %v1812, %v1818
        %v1820 = vrcp.pop %v1819
        %v1821 = vmul.f32 1.0, %v1820
        %v1822 = vmul.f32 %v1803, %v1821
        %v1823 = vmul.f32 %v1822, %v1698
        %v1824 = vmul.f32 %v1822, %v1699
        %v1825 = vmul.f32 %v1806, %v1821
        %v1826 = vmul.f32 %v1825, %v1776
        %v1827 = vmul.f32 %v1825, %v1778
        %v1828 = vadd.f32 %v1823, %v1826
        %v1829 = vadd.f32 %v1824, %v1827
        %1830 = vst [vmem:[%s379] sm:$0xff] %v1828
        %1831 = vst [vmem:[%s379 + $0x8] sm:$0xff] %v1829
        %s1832 = sand.u32 %s269, 1
        %s1833 = scalar_lea.sflag [#allocation3], %s1832
        %s1834 = sand.u32 %s269, 1
        %s1835 = smul.addr %s1834, 16
        %s1836 = scalar_lea.vmem [#allocation2], %s1835
        // Predicated region
        $region65: #{tpu_custom_call.1} parent=63 // pred_check
          %p1837 = pneg %p279
        $region66: #{tpu_custom_call.1} parent=63 // pred_check_branch
          %1839 = sbr.rel (%p1837) target = $region68
        $region67: #{tpu_custom_call.1} parent=63 // pred_region
          %s1841 = ssub.s32 256, 256
          %1842 = vsyncadd %s1833, %s1841
          %s1843 = smul.addr %s25, 2
          %s1844 = smul.addr %s1843, 128
          %s1845 = scalar_lea.hbm %s11, %s1844
          %s1847 = sshll.u32 %s1836, 4
          %s1848 = int_to_ptr.vmem [resolvable:$true] %s1847
          %1850 = dma.vmem_to_hbm [thread:$0]  %s1848, 256, %s1845, %s1833
        $region68: #{tpu_custom_call.1} parent=63 // pred_fallthru
          _
      $region64: #{tpu_custom_call.1} parent=5 // pred_fallthru
        _
      %p1851 = scmp.le.s32.totalorder 2, %s20
      // Predicated region
      $region69: #{tpu_custom_call.1} parent=5 // pred_check
        %p1852 = pneg %p1851
      $region70: #{tpu_custom_call.1} parent=5 // pred_check_branch
        %1854 = sbr.rel (%p1852) target = $region72
      $region71: #{tpu_custom_call.1} parent=5 // pred_region
        %s1855 = ssub.s32 %s20, 2
        // Predicated region
        $region73: #{tpu_custom_call.1} parent=71 // pred_check
          %p1856 = pneg %p285
        $region74: #{tpu_custom_call.1} parent=71 // pred_check_branch
          %1858 = sbr.rel (%p1856) target = $region76
        $region75: #{tpu_custom_call.1} parent=71 // pred_region
          %s1859 = sand.u32 %s270, 1
          %s1860 = scalar_lea.sflag [#allocation3], %s1859
          %s1861 = sand.u32 %s270, 1
          %s1862 = smul.addr %s1861, 16
          %s1863 = scalar_lea.vmem [#allocation2], %s1862
          %1864 = dma.done %s1860, 256
        $region76: #{tpu_custom_call.1} parent=71 // pred_fallthru
          _
      $region72: #{tpu_custom_call.1} parent=5 // pred_fallthru
        _
    $region6: #{tpu_custom_call.1} parent=1 // loop_footer
      %s24 = sadd.s32 1, %s20
    $region7: #{tpu_custom_call.1} parent=1 // loop_footer_branch
      %19 = sbr.rel target = $region3
    $region8: #{tpu_custom_call.1} parent=1 // loop_exit
      _
    %1865 = vsyncpa [#allocation3], 1
    %s1866 = scalar_lea.sflag [#allocation3], 1
    %1867 = vsyncpa %s1866, 1

</llo_original>
